<compile_context>
chip_gen: v7x
topology: tpu7x:2x2x1
jax: 0.10.0
libtpu: 0.0.40
codegen_flags: <defaults>
</compile_context>

<pallas_src>
import numpy as np
import jax
import jax.numpy as jnp
from jax.experimental import pallas as pl
from jax.experimental.pallas import tpu as pltpu

EPS = 1e-5
BN_SCALE = 1.0 / np.sqrt(1.0 + EPS)  # eval BatchNorm with default running stats


def _build_tap_masks(C, N, H, W):
    """Static per-tap (flat lane shift, validity mask) for depthwise 3x3, padding=1.

    Activations are (C, N*HW) with lane index p = n*HW + h*W + w.  Tap (dy, dx) reads
    y[p + dy*W + dx], valid only when 0 <= h+dy < H and 0 <= w+dx < W.  Masks are built
    once, directly at (C, N*HW) (no later re-broadcast), and are PERIODIC over HW
    (local coords = p mod HW), so a circular pltpu.roll that wraps across an image
    boundary is always masked -> zero-padding semantics hold for every stacked image.
    """
    HW = H * W
    NHW = N * HW
    pos = jax.lax.broadcasted_iota(jnp.int32, (C, NHW), 1)   # TPU iota must be >= 2D
    if (HW & (HW - 1)) == 0 and (W & (W - 1)) == 0:
        # Power-of-two sizes: pure bit ops on the VPU (no float divide/floor).
        q = pos & (HW - 1)                                   # local position within image
        row = jnp.right_shift(q, int(np.log2(W)))
        col = q & (W - 1)
    else:
        # Fallback: exact float math (values are small integers).
        posf = pos.astype(jnp.float32)
        qf = posf - jnp.floor(posf / HW) * HW
        row = jnp.floor(qf / W)
        col = qf - row * W

    taps = []
    for dy in (-1, 0, 1):
        for dx in (-1, 0, 1):            # tap index k = (dy+1)*3 + (dx+1) matches wd columns
            conds = []
            if dy == -1:
                conds.append(row >= 1)
            elif dy == 1:
                conds.append(row <= H - 2)
            if dx == -1:
                conds.append(col >= 1)
            elif dx == 1:
                conds.append(col <= W - 2)
            mask = None
            for c in conds:
                mask = c if mask is None else jnp.logical_and(mask, c)
            taps.append((dy * W + dx, mask))
    return taps


def _half_block(x, w1, b1, wd, bd, taps, ones_col, N, HW, inv_hw):
    """One half of ConvBlock on the lane-stacked batch.

    x  : (Cin, N*HW)  activations, image n on lanes [n*HW, (n+1)*HW)
    w1 : (Cout, Cin)  1x1 conv weight   (PyTorch weight[:, :, 0, 0])
    b1 : (Cout, 1)    1x1 conv bias
    wd : (Cout, 9)    depthwise 3x3 weight (PyTorch (Cout,1,3,3).reshape(Cout, 9))
    bd : (Cout, 1)    depthwise conv bias
    """
    NHW = x.shape[1]
    C = w1.shape[0]

    # --- 1x1 conv: one lane-dense MXU matmul covering every image at once ---
    y = jnp.dot(w1, x, preferred_element_type=jnp.float32) + b1

    # --- depthwise 3x3, padding=1: 9 XLU lane rolls + pre-built periodic masks ---
    acc = jnp.broadcast_to(bd, (C, NHW))                 # hoisted out of the tap loop
    for k, (off, mask) in enumerate(taps):
        tap = wd[:, k:k + 1]                             # (C, 1) per-channel tap weight
        shifted = y if off == 0 else pltpu.roll(y, (-off) % NHW, axis=1)
        contrib = shifted * tap
        if mask is not None:                             # mask already (C, NHW): no re-broadcast
            contrib = jnp.where(mask, contrib, 0.0)
        acc = acc + contrib

    # --- per-image InstanceNorm + folded eval-BatchNorm + ReLU (+ Dropout == id) ---
    # Reductions go to the (idle) MXU: [a; a*a] (2C,HW) @ ones (HW,1) -> sum, sum(x^2).
    outs = []
    for n in range(N):
        a = acc[:, n * HW:(n + 1) * HW]                  # 128-aligned static lane slice
        s = jnp.dot(jnp.concatenate([a, a * a], axis=0), ones_col,
                    preferred_element_type=jnp.float32)  # (2C, 1)
        mu = s[:C] * inv_hw
        var = s[C:] * inv_hw - mu * mu
        scale = jax.lax.rsqrt(var + EPS) * BN_SCALE      # eval-BN scale folded in
        outs.append(jnp.maximum((a - mu) * scale, 0.0))
    return jnp.concatenate(outs, axis=1) if N > 1 else outs[0]


def conv_block(x_nchw, params):
    """ConvBlock forward.  x_nchw: (N, Cin, H, W) f32 -> (N, Cout, H, W) f32."""
    N, Cin, H, W = x_nchw.shape
    Cout = params["w1a"].shape[0]
    HW = H * W
    inv_hw = 1.0 / HW

    def kernel(x_ref, w1a_ref, b1a_ref, wda_ref, bda_ref,
               w1b_ref, b1b_ref, wdb_ref, bdb_ref, o_ref):
        # Built once per invocation; shared by both halves and all images.
        taps = _build_tap_masks(Cout, N, H, W)
        ones_col = jnp.ones((HW, 1), jnp.float32)

        # Lane-stack the batch: (Cin, N*HW); per-image blocks on 128-aligned lanes.
        if N > 1:
            x = jnp.concatenate([x_ref[n] for n in range(N)], axis=1)
        else:
            x = x_ref[0]

        h = _half_block(x, w1a_ref[...], b1a_ref[...], wda_ref[...], bda_ref[...],
                        taps, ones_col, N, HW, inv_hw)
        h = _half_block(h, w1b_ref[...], b1b_ref[...], wdb_ref[...], bdb_ref[...],
                        taps, ones_col, N, HW, inv_hw)

        # Un-stack: write each image's 128-aligned lane slice back (lane-dense stores).
        for n in range(N):
            o_ref[n] = h[:, n * HW:(n + 1) * HW].astype(o_ref.dtype)

    vmem = pltpu.MemorySpace.VMEM
    out_flat = pl.pallas_call(
        kernel,
        out_shape=jax.ShapeDtypeStruct((N, Cout, HW), jnp.float32),   # last dim = 256: lane dense
        in_specs=[pl.BlockSpec(memory_space=vmem)] * 9,               # whole (tiny) arrays in VMEM
        out_specs=pl.BlockSpec(memory_space=vmem),
    )(x_nchw.reshape(N, Cin, HW),
      params["w1a"], params["b1a"], params["wda"], params["bda"],
      params["w1b"], params["b1b"], params["wdb"], params["bdb"])
    return out_flat.reshape(N, Cout, H, W)


def reference(x_nchw, p):
    """Pure-JAX reference (NCHW) of the same eval-mode ConvBlock."""
    def half(x, w1, b1, wd, bd):
        Nn, _, H, W = x.shape
        C = w1.shape[0]
        y = jnp.einsum("oc,nchw->nohw", w1, x) + b1.reshape(1, C, 1, 1)
        yp = jnp.pad(y, ((0, 0), (0, 0), (1, 1), (1, 1)))
        acc = jnp.broadcast_to(bd.reshape(1, C, 1, 1), y.shape)
        for ky in range(3):
            for kx in range(3):
                acc = acc + yp[:, :, ky:ky + H, kx:kx + W] * wd[:, ky * 3 + kx].reshape(1, C, 1, 1)
        mu = acc.mean(axis=(2, 3), keepdims=True)
        var = ((acc - mu) ** 2).mean(axis=(2, 3), keepdims=True)
        z = (acc - mu) * jax.lax.rsqrt(var + EPS) * BN_SCALE
        return jnp.maximum(z, 0.0)

    h = half(x_nchw, p["w1a"], p["b1a"], p["wda"], p["bda"])
    return half(h, p["w1b"], p["b1b"], p["wdb"], p["bdb"])


if __name__ == "__main__":
    N, Cin, Cout, H, W = 2, 4, 8, 16, 16

    key = jax.random.PRNGKey(0)
    ks = jax.random.split(key, 9)
    params = {
        # PyTorch Conv2d(Cin, Cout, 1).weight[:, :, 0, 0]                        -> (Cout, Cin)
        "w1a": jax.random.normal(ks[0], (Cout, Cin), jnp.float32) * 0.3,
        "b1a": jax.random.normal(ks[1], (Cout, 1), jnp.float32) * 0.1,
        # PyTorch Conv2d(Cout, Cout, 3, groups=Cout).weight.reshape(Cout, 9)     -> (Cout, 9)
        "wda": jax.random.normal(ks[2], (Cout, 9), jnp.float32) * 0.3,
        "bda": jax.random.normal(ks[3], (Cout, 1), jnp.float32) * 0.1,
        "w1b": jax.random.normal(ks[4], (Cout, Cout), jnp.float32) * 0.3,
        "b1b": jax.random.normal(ks[5], (Cout, 1), jnp.float32) * 0.1,
        "wdb": jax.random.normal(ks[6], (Cout, 9), jnp.float32) * 0.3,
        "bdb": jax.random.normal(ks[7], (Cout, 1), jnp.float32) * 0.1,
    }

    # Inputs/outputs stay in PyTorch NCHW convention (reshapes are free; no transposes).
    x_nchw = jax.random.normal(ks[8], (N, Cin, H, W), jnp.float32)

    out = conv_block(x_nchw, params)
    jax.block_until_ready(out)

    ref = reference(x_nchw, params)
    # 5e-4: allows for MXU f32 matmul rounding in the conv and in the ones-vector
    # reduction vs. the reference's exact-f32 mean/var; real bugs would be O(0.1-1).
    np.testing.assert_allclose(np.asarray(out), np.asarray(ref), atol=5e-4, rtol=5e-4)
    print("KERNEL_OK")
</pallas_src>

<mosaic_0001>
module attributes {stable_mosaic.version = 11 : i64} {
  func.func @kernel(%arg0: memref<2x4x256xf32, #tpu.memory_space<vmem>>, %arg1: memref<8x4xf32, #tpu.memory_space<vmem>>, %arg2: memref<8x1xf32, #tpu.memory_space<vmem>>, %arg3: memref<8x9xf32, #tpu.memory_space<vmem>>, %arg4: memref<8x1xf32, #tpu.memory_space<vmem>>, %arg5: memref<8x8xf32, #tpu.memory_space<vmem>>, %arg6: memref<8x1xf32, #tpu.memory_space<vmem>>, %arg7: memref<8x9xf32, #tpu.memory_space<vmem>>, %arg8: memref<8x1xf32, #tpu.memory_space<vmem>>, %arg9: memref<2x8x256xf32, #tpu.memory_space<vmem>>) attributes {dimension_semantics = [], scalar_prefetch = 0 : i64, scratch_operands = 0 : i64, tpu.core_type = #tpu.core_type<tc>} {
    %0 = tpu.iota {dimensions = array<i32: 1>} : vector<8x512xi32>
    %c255_i32 = arith.constant 255 : i32
    %1 = vector.broadcast %c255_i32 : i32 to vector<8x512xi32>
    %2 = arith.andi %0, %1 : vector<8x512xi32>
    %c4_i32 = arith.constant 4 : i32
    %3 = vector.broadcast %c4_i32 : i32 to vector<8x512xi32>
    %4 = arith.shrsi %2, %3 : vector<8x512xi32>
    %c15_i32 = arith.constant 15 : i32
    %5 = vector.broadcast %c15_i32 : i32 to vector<8x512xi32>
    %6 = arith.andi %2, %5 : vector<8x512xi32>
    %c1_i32 = arith.constant 1 : i32
    %7 = vector.broadcast %c1_i32 : i32 to vector<8x512xi32>
    %8 = arith.cmpi sge, %4, %7 : vector<8x512xi32>
    %c1_i32_0 = arith.constant 1 : i32
    %9 = vector.broadcast %c1_i32_0 : i32 to vector<8x512xi32>
    %10 = arith.cmpi sge, %6, %9 : vector<8x512xi32>
    %11 = arith.andi %8, %10 : vector<8x512xi1>
    %c1_i32_1 = arith.constant 1 : i32
    %12 = vector.broadcast %c1_i32_1 : i32 to vector<8x512xi32>
    %13 = arith.cmpi sge, %4, %12 : vector<8x512xi32>
    %c1_i32_2 = arith.constant 1 : i32
    %14 = vector.broadcast %c1_i32_2 : i32 to vector<8x512xi32>
    %15 = arith.cmpi sge, %4, %14 : vector<8x512xi32>
    %c14_i32 = arith.constant 14 : i32
    %16 = vector.broadcast %c14_i32 : i32 to vector<8x512xi32>
    %17 = arith.cmpi sle, %6, %16 : vector<8x512xi32>
    %18 = arith.andi %15, %17 : vector<8x512xi1>
    %c1_i32_3 = arith.constant 1 : i32
    %19 = vector.broadcast %c1_i32_3 : i32 to vector<8x512xi32>
    %20 = arith.cmpi sge, %6, %19 : vector<8x512xi32>
    %c14_i32_4 = arith.constant 14 : i32
    %21 = vector.broadcast %c14_i32_4 : i32 to vector<8x512xi32>
    %22 = arith.cmpi sle, %6, %21 : vector<8x512xi32>
    %c14_i32_5 = arith.constant 14 : i32
    %23 = vector.broadcast %c14_i32_5 : i32 to vector<8x512xi32>
    %24 = arith.cmpi sle, %4, %23 : vector<8x512xi32>
    %c1_i32_6 = arith.constant 1 : i32
    %25 = vector.broadcast %c1_i32_6 : i32 to vector<8x512xi32>
    %26 = arith.cmpi sge, %6, %25 : vector<8x512xi32>
    %27 = arith.andi %24, %26 : vector<8x512xi1>
    %c14_i32_7 = arith.constant 14 : i32
    %28 = vector.broadcast %c14_i32_7 : i32 to vector<8x512xi32>
    %29 = arith.cmpi sle, %4, %28 : vector<8x512xi32>
    %c14_i32_8 = arith.constant 14 : i32
    %30 = vector.broadcast %c14_i32_8 : i32 to vector<8x512xi32>
    %31 = arith.cmpi sle, %4, %30 : vector<8x512xi32>
    %c14_i32_9 = arith.constant 14 : i32
    %32 = vector.broadcast %c14_i32_9 : i32 to vector<8x512xi32>
    %33 = arith.cmpi sle, %6, %32 : vector<8x512xi32>
    %34 = arith.andi %31, %33 : vector<8x512xi1>
    %cst = arith.constant 1.000000e+00 : f32
    %35 = vector.broadcast %cst : f32 to vector<256x1xf32>
    %c0 = arith.constant 0 : index
    %c0_10 = arith.constant 0 : index
    %c0_11 = arith.constant 0 : index
    %36 = vector.load %arg0[%c0, %c0_10, %c0_11] : memref<2x4x256xf32, #tpu.memory_space<vmem>>, vector<1x4x256xf32>
    %37 = vector.shape_cast %36 : vector<1x4x256xf32> to vector<4x256xf32>
    %c1 = arith.constant 1 : index
    %c0_12 = arith.constant 0 : index
    %c0_13 = arith.constant 0 : index
    %38 = vector.load %arg0[%c1, %c0_12, %c0_13] : memref<2x4x256xf32, #tpu.memory_space<vmem>>, vector<1x4x256xf32>
    %39 = vector.shape_cast %38 : vector<1x4x256xf32> to vector<4x256xf32>
    %40 = tpu.concatenate %37, %39 in 1 : vector<4x256xf32>, vector<4x256xf32> -> vector<4x512xf32>
    %c0_14 = arith.constant 0 : index
    %c0_15 = arith.constant 0 : index
    %41 = vector.load %arg1[%c0_14, %c0_15] : memref<8x4xf32, #tpu.memory_space<vmem>>, vector<8x4xf32>
    %c0_16 = arith.constant 0 : index
    %c0_17 = arith.constant 0 : index
    %42 = vector.load %arg2[%c0_16, %c0_17] : memref<8x1xf32, #tpu.memory_space<vmem>>, vector<8x1xf32>
    %c0_18 = arith.constant 0 : index
    %c0_19 = arith.constant 0 : index
    %43 = vector.load %arg3[%c0_18, %c0_19] : memref<8x9xf32, #tpu.memory_space<vmem>>, vector<8x9xf32>
    %c0_20 = arith.constant 0 : index
    %c0_21 = arith.constant 0 : index
    %44 = vector.load %arg4[%c0_20, %c0_21] : memref<8x1xf32, #tpu.memory_space<vmem>>, vector<8x1xf32>
    %cst_22 = arith.constant dense<0.000000e+00> : vector<8x512xf32>
    %45 = tpu.matmul %41, %40, %cst_22 {dimension_numbers = #tpu.dot_dimension_numbers<[1], [0], [0], [1], [0, 0, 1, 1], [], []>} : vector<8x4xf32>, vector<4x512xf32>, vector<8x512xf32> -> vector<8x512xf32>
    %46 = vector.broadcast %42 : vector<8x1xf32> to vector<8x512xf32>
    %47 = arith.addf %45, %46 : vector<8x512xf32>
    %48 = vector.shape_cast %44 : vector<8x1xf32> to vector<8x1xf32>
    %49 = vector.broadcast %48 : vector<8x1xf32> to vector<8x512xf32>
    %50 = vector.extract_strided_slice %43 {offsets = [0, 0], sizes = [8, 1], strides = [1, 1]} : vector<8x9xf32> to vector<8x1xf32>
    %c17_i32 = arith.constant 17 : i32
    %51 = tpu.dynamic_rotate %47 by %c17_i32 dim 1 : vector<8x512xf32>, i32 -> vector<8x512xf32>
    %52 = vector.broadcast %50 : vector<8x1xf32> to vector<8x512xf32>
    %53 = arith.mulf %51, %52 : vector<8x512xf32>
    %cst_23 = arith.constant 0.000000e+00 : f32
    %54 = vector.broadcast %cst_23 : f32 to vector<8x512xf32>
    %55 = arith.select %11, %53, %54 : vector<8x512xi1>, vector<8x512xf32>
    %56 = arith.addf %49, %55 : vector<8x512xf32>
    %57 = vector.extract_strided_slice %43 {offsets = [0, 1], sizes = [8, 1], strides = [1, 1]} : vector<8x9xf32> to vector<8x1xf32>
    %c16_i32 = arith.constant 16 : i32
    %58 = tpu.dynamic_rotate %47 by %c16_i32 dim 1 : vector<8x512xf32>, i32 -> vector<8x512xf32>
    %59 = vector.broadcast %57 : vector<8x1xf32> to vector<8x512xf32>
    %60 = arith.mulf %58, %59 : vector<8x512xf32>
    %cst_24 = arith.constant 0.000000e+00 : f32
    %61 = vector.broadcast %cst_24 : f32 to vector<8x512xf32>
    %62 = arith.select %13, %60, %61 : vector<8x512xi1>, vector<8x512xf32>
    %63 = arith.addf %56, %62 : vector<8x512xf32>
    %64 = vector.extract_strided_slice %43 {offsets = [0, 2], sizes = [8, 1], strides = [1, 1]} : vector<8x9xf32> to vector<8x1xf32>
    %c15_i32_25 = arith.constant 15 : i32
    %65 = tpu.dynamic_rotate %47 by %c15_i32_25 dim 1 : vector<8x512xf32>, i32 -> vector<8x512xf32>
    %66 = vector.broadcast %64 : vector<8x1xf32> to vector<8x512xf32>
    %67 = arith.mulf %65, %66 : vector<8x512xf32>
    %cst_26 = arith.constant 0.000000e+00 : f32
    %68 = vector.broadcast %cst_26 : f32 to vector<8x512xf32>
    %69 = arith.select %18, %67, %68 : vector<8x512xi1>, vector<8x512xf32>
    %70 = arith.addf %63, %69 : vector<8x512xf32>
    %71 = vector.extract_strided_slice %43 {offsets = [0, 3], sizes = [8, 1], strides = [1, 1]} : vector<8x9xf32> to vector<8x1xf32>
    %c1_i32_27 = arith.constant 1 : i32
    %72 = tpu.dynamic_rotate %47 by %c1_i32_27 dim 1 : vector<8x512xf32>, i32 -> vector<8x512xf32>
    %73 = vector.broadcast %71 : vector<8x1xf32> to vector<8x512xf32>
    %74 = arith.mulf %72, %73 : vector<8x512xf32>
    %cst_28 = arith.constant 0.000000e+00 : f32
    %75 = vector.broadcast %cst_28 : f32 to vector<8x512xf32>
    %76 = arith.select %20, %74, %75 : vector<8x512xi1>, vector<8x512xf32>
    %77 = arith.addf %70, %76 : vector<8x512xf32>
    %78 = vector.extract_strided_slice %43 {offsets = [0, 4], sizes = [8, 1], strides = [1, 1]} : vector<8x9xf32> to vector<8x1xf32>
    %79 = vector.broadcast %78 : vector<8x1xf32> to vector<8x512xf32>
    %80 = arith.mulf %47, %79 : vector<8x512xf32>
    %81 = arith.addf %77, %80 : vector<8x512xf32>
    %82 = vector.extract_strided_slice %43 {offsets = [0, 5], sizes = [8, 1], strides = [1, 1]} : vector<8x9xf32> to vector<8x1xf32>
    %c511_i32 = arith.constant 511 : i32
    %83 = tpu.dynamic_rotate %47 by %c511_i32 dim 1 : vector<8x512xf32>, i32 -> vector<8x512xf32>
    %84 = vector.broadcast %82 : vector<8x1xf32> to vector<8x512xf32>
    %85 = arith.mulf %83, %84 : vector<8x512xf32>
    %cst_29 = arith.constant 0.000000e+00 : f32
    %86 = vector.broadcast %cst_29 : f32 to vector<8x512xf32>
    %87 = arith.select %22, %85, %86 : vector<8x512xi1>, vector<8x512xf32>
    %88 = arith.addf %81, %87 : vector<8x512xf32>
    %89 = vector.extract_strided_slice %43 {offsets = [0, 6], sizes = [8, 1], strides = [1, 1]} : vector<8x9xf32> to vector<8x1xf32>
    %c497_i32 = arith.constant 497 : i32
    %90 = tpu.dynamic_rotate %47 by %c497_i32 dim 1 : vector<8x512xf32>, i32 -> vector<8x512xf32>
    %91 = vector.broadcast %89 : vector<8x1xf32> to vector<8x512xf32>
    %92 = arith.mulf %90, %91 : vector<8x512xf32>
    %cst_30 = arith.constant 0.000000e+00 : f32
    %93 = vector.broadcast %cst_30 : f32 to vector<8x512xf32>
    %94 = arith.select %27, %92, %93 : vector<8x512xi1>, vector<8x512xf32>
    %95 = arith.addf %88, %94 : vector<8x512xf32>
    %96 = vector.extract_strided_slice %43 {offsets = [0, 7], sizes = [8, 1], strides = [1, 1]} : vector<8x9xf32> to vector<8x1xf32>
    %c496_i32 = arith.constant 496 : i32
    %97 = tpu.dynamic_rotate %47 by %c496_i32 dim 1 : vector<8x512xf32>, i32 -> vector<8x512xf32>
    %98 = vector.broadcast %96 : vector<8x1xf32> to vector<8x512xf32>
    %99 = arith.mulf %97, %98 : vector<8x512xf32>
    %cst_31 = arith.constant 0.000000e+00 : f32
    %100 = vector.broadcast %cst_31 : f32 to vector<8x512xf32>
    %101 = arith.select %29, %99, %100 : vector<8x512xi1>, vector<8x512xf32>
    %102 = arith.addf %95, %101 : vector<8x512xf32>
    %103 = vector.extract_strided_slice %43 {offsets = [0, 8], sizes = [8, 1], strides = [1, 1]} : vector<8x9xf32> to vector<8x1xf32>
    %c495_i32 = arith.constant 495 : i32
    %104 = tpu.dynamic_rotate %47 by %c495_i32 dim 1 : vector<8x512xf32>, i32 -> vector<8x512xf32>
    %105 = vector.broadcast %103 : vector<8x1xf32> to vector<8x512xf32>
    %106 = arith.mulf %104, %105 : vector<8x512xf32>
    %cst_32 = arith.constant 0.000000e+00 : f32
    %107 = vector.broadcast %cst_32 : f32 to vector<8x512xf32>
    %108 = arith.select %34, %106, %107 : vector<8x512xi1>, vector<8x512xf32>
    %109 = arith.addf %102, %108 : vector<8x512xf32>
    %110 = vector.extract_strided_slice %109 {offsets = [0, 0], sizes = [8, 256], strides = [1, 1]} : vector<8x512xf32> to vector<8x256xf32>
    %111 = arith.mulf %110, %110 : vector<8x256xf32>
    %112 = tpu.concatenate %110, %111 in 0 : vector<8x256xf32>, vector<8x256xf32> -> vector<16x256xf32>
    %cst_33 = arith.constant dense<0.000000e+00> : vector<16x1xf32>
    %113 = tpu.matmul %112, %35, %cst_33 {dimension_numbers = #tpu.dot_dimension_numbers<[1], [0], [0], [1], [0, 0, 1, 1], [], []>} : vector<16x256xf32>, vector<256x1xf32>, vector<16x1xf32> -> vector<16x1xf32>
    %114 = vector.extract_strided_slice %113 {offsets = [0, 0], sizes = [8, 1], strides = [1, 1]} : vector<16x1xf32> to vector<8x1xf32>
    %cst_34 = arith.constant 3.906250e-03 : f32
    %115 = vector.broadcast %cst_34 : f32 to vector<8x1xf32>
    %116 = arith.mulf %114, %115 : vector<8x1xf32>
    %117 = vector.extract_strided_slice %113 {offsets = [8, 0], sizes = [8, 1], strides = [1, 1]} : vector<16x1xf32> to vector<8x1xf32>
    %cst_35 = arith.constant 3.906250e-03 : f32
    %118 = vector.broadcast %cst_35 : f32 to vector<8x1xf32>
    %119 = arith.mulf %117, %118 : vector<8x1xf32>
    %120 = arith.mulf %116, %116 : vector<8x1xf32>
    %121 = arith.subf %119, %120 : vector<8x1xf32>
    %cst_36 = arith.constant 9.99999974E-6 : f32
    %122 = vector.broadcast %cst_36 : f32 to vector<8x1xf32>
    %123 = arith.addf %121, %122 : vector<8x1xf32>
    %124 = math.rsqrt %123 : vector<8x1xf32>
    %cst_37 = arith.constant 0.999994993 : f32
    %125 = vector.broadcast %cst_37 : f32 to vector<8x1xf32>
    %126 = arith.mulf %124, %125 : vector<8x1xf32>
    %127 = vector.broadcast %116 : vector<8x1xf32> to vector<8x256xf32>
    %128 = arith.subf %110, %127 : vector<8x256xf32>
    %129 = vector.broadcast %126 : vector<8x1xf32> to vector<8x256xf32>
    %130 = arith.mulf %128, %129 : vector<8x256xf32>
    %cst_38 = arith.constant 0.000000e+00 : f32
    %131 = vector.broadcast %cst_38 : f32 to vector<8x256xf32>
    %132 = arith.maximumf %130, %131 : vector<8x256xf32>
    %133 = vector.extract_strided_slice %109 {offsets = [0, 256], sizes = [8, 256], strides = [1, 1]} : vector<8x512xf32> to vector<8x256xf32>
    %134 = arith.mulf %133, %133 : vector<8x256xf32>
    %135 = tpu.concatenate %133, %134 in 0 : vector<8x256xf32>, vector<8x256xf32> -> vector<16x256xf32>
    %cst_39 = arith.constant dense<0.000000e+00> : vector<16x1xf32>
    %136 = tpu.matmul %135, %35, %cst_39 {dimension_numbers = #tpu.dot_dimension_numbers<[1], [0], [0], [1], [0, 0, 1, 1], [], []>} : vector<16x256xf32>, vector<256x1xf32>, vector<16x1xf32> -> vector<16x1xf32>
    %137 = vector.extract_strided_slice %136 {offsets = [0, 0], sizes = [8, 1], strides = [1, 1]} : vector<16x1xf32> to vector<8x1xf32>
    %cst_40 = arith.constant 3.906250e-03 : f32
    %138 = vector.broadcast %cst_40 : f32 to vector<8x1xf32>
    %139 = arith.mulf %137, %138 : vector<8x1xf32>
    %140 = vector.extract_strided_slice %136 {offsets = [8, 0], sizes = [8, 1], strides = [1, 1]} : vector<16x1xf32> to vector<8x1xf32>
    %cst_41 = arith.constant 3.906250e-03 : f32
    %141 = vector.broadcast %cst_41 : f32 to vector<8x1xf32>
    %142 = arith.mulf %140, %141 : vector<8x1xf32>
    %143 = arith.mulf %139, %139 : vector<8x1xf32>
    %144 = arith.subf %142, %143 : vector<8x1xf32>
    %cst_42 = arith.constant 9.99999974E-6 : f32
    %145 = vector.broadcast %cst_42 : f32 to vector<8x1xf32>
    %146 = arith.addf %144, %145 : vector<8x1xf32>
    %147 = math.rsqrt %146 : vector<8x1xf32>
    %cst_43 = arith.constant 0.999994993 : f32
    %148 = vector.broadcast %cst_43 : f32 to vector<8x1xf32>
    %149 = arith.mulf %147, %148 : vector<8x1xf32>
    %150 = vector.broadcast %139 : vector<8x1xf32> to vector<8x256xf32>
    %151 = arith.subf %133, %150 : vector<8x256xf32>
    %152 = vector.broadcast %149 : vector<8x1xf32> to vector<8x256xf32>
    %153 = arith.mulf %151, %152 : vector<8x256xf32>
    %cst_44 = arith.constant 0.000000e+00 : f32
    %154 = vector.broadcast %cst_44 : f32 to vector<8x256xf32>
    %155 = arith.maximumf %153, %154 : vector<8x256xf32>
    %156 = tpu.concatenate %132, %155 in 1 : vector<8x256xf32>, vector<8x256xf32> -> vector<8x512xf32>
    %c0_45 = arith.constant 0 : index
    %c0_46 = arith.constant 0 : index
    %157 = vector.load %arg5[%c0_45, %c0_46] : memref<8x8xf32, #tpu.memory_space<vmem>>, vector<8x8xf32>
    %c0_47 = arith.constant 0 : index
    %c0_48 = arith.constant 0 : index
    %158 = vector.load %arg6[%c0_47, %c0_48] : memref<8x1xf32, #tpu.memory_space<vmem>>, vector<8x1xf32>
    %c0_49 = arith.constant 0 : index
    %c0_50 = arith.constant 0 : index
    %159 = vector.load %arg7[%c0_49, %c0_50] : memref<8x9xf32, #tpu.memory_space<vmem>>, vector<8x9xf32>
    %c0_51 = arith.constant 0 : index
    %c0_52 = arith.constant 0 : index
    %160 = vector.load %arg8[%c0_51, %c0_52] : memref<8x1xf32, #tpu.memory_space<vmem>>, vector<8x1xf32>
    %cst_53 = arith.constant dense<0.000000e+00> : vector<8x512xf32>
    %161 = tpu.matmul %157, %156, %cst_53 {dimension_numbers = #tpu.dot_dimension_numbers<[1], [0], [0], [1], [0, 0, 1, 1], [], []>} : vector<8x8xf32>, vector<8x512xf32>, vector<8x512xf32> -> vector<8x512xf32>
    %162 = vector.broadcast %158 : vector<8x1xf32> to vector<8x512xf32>
    %163 = arith.addf %161, %162 : vector<8x512xf32>
    %164 = vector.shape_cast %160 : vector<8x1xf32> to vector<8x1xf32>
    %165 = vector.broadcast %164 : vector<8x1xf32> to vector<8x512xf32>
    %166 = vector.extract_strided_slice %159 {offsets = [0, 0], sizes = [8, 1], strides = [1, 1]} : vector<8x9xf32> to vector<8x1xf32>
    %c17_i32_54 = arith.constant 17 : i32
    %167 = tpu.dynamic_rotate %163 by %c17_i32_54 dim 1 : vector<8x512xf32>, i32 -> vector<8x512xf32>
    %168 = vector.broadcast %166 : vector<8x1xf32> to vector<8x512xf32>
    %169 = arith.mulf %167, %168 : vector<8x512xf32>
    %cst_55 = arith.constant 0.000000e+00 : f32
    %170 = vector.broadcast %cst_55 : f32 to vector<8x512xf32>
    %171 = arith.select %11, %169, %170 : vector<8x512xi1>, vector<8x512xf32>
    %172 = arith.addf %165, %171 : vector<8x512xf32>
    %173 = vector.extract_strided_slice %159 {offsets = [0, 1], sizes = [8, 1], strides = [1, 1]} : vector<8x9xf32> to vector<8x1xf32>
    %c16_i32_56 = arith.constant 16 : i32
    %174 = tpu.dynamic_rotate %163 by %c16_i32_56 dim 1 : vector<8x512xf32>, i32 -> vector<8x512xf32>
    %175 = vector.broadcast %173 : vector<8x1xf32> to vector<8x512xf32>
    %176 = arith.mulf %174, %175 : vector<8x512xf32>
    %cst_57 = arith.constant 0.000000e+00 : f32
    %177 = vector.broadcast %cst_57 : f32 to vector<8x512xf32>
    %178 = arith.select %13, %176, %177 : vector<8x512xi1>, vector<8x512xf32>
    %179 = arith.addf %172, %178 : vector<8x512xf32>
    %180 = vector.extract_strided_slice %159 {offsets = [0, 2], sizes = [8, 1], strides = [1, 1]} : vector<8x9xf32> to vector<8x1xf32>
    %c15_i32_58 = arith.constant 15 : i32
    %181 = tpu.dynamic_rotate %163 by %c15_i32_58 dim 1 : vector<8x512xf32>, i32 -> vector<8x512xf32>
    %182 = vector.broadcast %180 : vector<8x1xf32> to vector<8x512xf32>
    %183 = arith.mulf %181, %182 : vector<8x512xf32>
    %cst_59 = arith.constant 0.000000e+00 : f32
    %184 = vector.broadcast %cst_59 : f32 to vector<8x512xf32>
    %185 = arith.select %18, %183, %184 : vector<8x512xi1>, vector<8x512xf32>
    %186 = arith.addf %179, %185 : vector<8x512xf32>
    %187 = vector.extract_strided_slice %159 {offsets = [0, 3], sizes = [8, 1], strides = [1, 1]} : vector<8x9xf32> to vector<8x1xf32>
    %c1_i32_60 = arith.constant 1 : i32
    %188 = tpu.dynamic_rotate %163 by %c1_i32_60 dim 1 : vector<8x512xf32>, i32 -> vector<8x512xf32>
    %189 = vector.broadcast %187 : vector<8x1xf32> to vector<8x512xf32>
    %190 = arith.mulf %188, %189 : vector<8x512xf32>
    %cst_61 = arith.constant 0.000000e+00 : f32
    %191 = vector.broadcast %cst_61 : f32 to vector<8x512xf32>
    %192 = arith.select %20, %190, %191 : vector<8x512xi1>, vector<8x512xf32>
    %193 = arith.addf %186, %192 : vector<8x512xf32>
    %194 = vector.extract_strided_slice %159 {offsets = [0, 4], sizes = [8, 1], strides = [1, 1]} : vector<8x9xf32> to vector<8x1xf32>
    %195 = vector.broadcast %194 : vector<8x1xf32> to vector<8x512xf32>
    %196 = arith.mulf %163, %195 : vector<8x512xf32>
    %197 = arith.addf %193, %196 : vector<8x512xf32>
    %198 = vector.extract_strided_slice %159 {offsets = [0, 5], sizes = [8, 1], strides = [1, 1]} : vector<8x9xf32> to vector<8x1xf32>
    %c511_i32_62 = arith.constant 511 : i32
    %199 = tpu.dynamic_rotate %163 by %c511_i32_62 dim 1 : vector<8x512xf32>, i32 -> vector<8x512xf32>
    %200 = vector.broadcast %198 : vector<8x1xf32> to vector<8x512xf32>
    %201 = arith.mulf %199, %200 : vector<8x512xf32>
    %cst_63 = arith.constant 0.000000e+00 : f32
    %202 = vector.broadcast %cst_63 : f32 to vector<8x512xf32>
    %203 = arith.select %22, %201, %202 : vector<8x512xi1>, vector<8x512xf32>
    %204 = arith.addf %197, %203 : vector<8x512xf32>
    %205 = vector.extract_strided_slice %159 {offsets = [0, 6], sizes = [8, 1], strides = [1, 1]} : vector<8x9xf32> to vector<8x1xf32>
    %c497_i32_64 = arith.constant 497 : i32
    %206 = tpu.dynamic_rotate %163 by %c497_i32_64 dim 1 : vector<8x512xf32>, i32 -> vector<8x512xf32>
    %207 = vector.broadcast %205 : vector<8x1xf32> to vector<8x512xf32>
    %208 = arith.mulf %206, %207 : vector<8x512xf32>
    %cst_65 = arith.constant 0.000000e+00 : f32
    %209 = vector.broadcast %cst_65 : f32 to vector<8x512xf32>
    %210 = arith.select %27, %208, %209 : vector<8x512xi1>, vector<8x512xf32>
    %211 = arith.addf %204, %210 : vector<8x512xf32>
    %212 = vector.extract_strided_slice %159 {offsets = [0, 7], sizes = [8, 1], strides = [1, 1]} : vector<8x9xf32> to vector<8x1xf32>
    %c496_i32_66 = arith.constant 496 : i32
    %213 = tpu.dynamic_rotate %163 by %c496_i32_66 dim 1 : vector<8x512xf32>, i32 -> vector<8x512xf32>
    %214 = vector.broadcast %212 : vector<8x1xf32> to vector<8x512xf32>
    %215 = arith.mulf %213, %214 : vector<8x512xf32>
    %cst_67 = arith.constant 0.000000e+00 : f32
    %216 = vector.broadcast %cst_67 : f32 to vector<8x512xf32>
    %217 = arith.select %29, %215, %216 : vector<8x512xi1>, vector<8x512xf32>
    %218 = arith.addf %211, %217 : vector<8x512xf32>
    %219 = vector.extract_strided_slice %159 {offsets = [0, 8], sizes = [8, 1], strides = [1, 1]} : vector<8x9xf32> to vector<8x1xf32>
    %c495_i32_68 = arith.constant 495 : i32
    %220 = tpu.dynamic_rotate %163 by %c495_i32_68 dim 1 : vector<8x512xf32>, i32 -> vector<8x512xf32>
    %221 = vector.broadcast %219 : vector<8x1xf32> to vector<8x512xf32>
    %222 = arith.mulf %220, %221 : vector<8x512xf32>
    %cst_69 = arith.constant 0.000000e+00 : f32
    %223 = vector.broadcast %cst_69 : f32 to vector<8x512xf32>
    %224 = arith.select %34, %222, %223 : vector<8x512xi1>, vector<8x512xf32>
    %225 = arith.addf %218, %224 : vector<8x512xf32>
    %226 = vector.extract_strided_slice %225 {offsets = [0, 0], sizes = [8, 256], strides = [1, 1]} : vector<8x512xf32> to vector<8x256xf32>
    %227 = arith.mulf %226, %226 : vector<8x256xf32>
    %228 = tpu.concatenate %226, %227 in 0 : vector<8x256xf32>, vector<8x256xf32> -> vector<16x256xf32>
    %cst_70 = arith.constant dense<0.000000e+00> : vector<16x1xf32>
    %229 = tpu.matmul %228, %35, %cst_70 {dimension_numbers = #tpu.dot_dimension_numbers<[1], [0], [0], [1], [0, 0, 1, 1], [], []>} : vector<16x256xf32>, vector<256x1xf32>, vector<16x1xf32> -> vector<16x1xf32>
    %230 = vector.extract_strided_slice %229 {offsets = [0, 0], sizes = [8, 1], strides = [1, 1]} : vector<16x1xf32> to vector<8x1xf32>
    %cst_71 = arith.constant 3.906250e-03 : f32
    %231 = vector.broadcast %cst_71 : f32 to vector<8x1xf32>
    %232 = arith.mulf %230, %231 : vector<8x1xf32>
    %233 = vector.extract_strided_slice %229 {offsets = [8, 0], sizes = [8, 1], strides = [1, 1]} : vector<16x1xf32> to vector<8x1xf32>
    %cst_72 = arith.constant 3.906250e-03 : f32
    %234 = vector.broadcast %cst_72 : f32 to vector<8x1xf32>
    %235 = arith.mulf %233, %234 : vector<8x1xf32>
    %236 = arith.mulf %232, %232 : vector<8x1xf32>
    %237 = arith.subf %235, %236 : vector<8x1xf32>
    %cst_73 = arith.constant 9.99999974E-6 : f32
    %238 = vector.broadcast %cst_73 : f32 to vector<8x1xf32>
    %239 = arith.addf %237, %238 : vector<8x1xf32>
    %240 = math.rsqrt %239 : vector<8x1xf32>
    %cst_74 = arith.constant 0.999994993 : f32
    %241 = vector.broadcast %cst_74 : f32 to vector<8x1xf32>
    %242 = arith.mulf %240, %241 : vector<8x1xf32>
    %243 = vector.broadcast %232 : vector<8x1xf32> to vector<8x256xf32>
    %244 = arith.subf %226, %243 : vector<8x256xf32>
    %245 = vector.broadcast %242 : vector<8x1xf32> to vector<8x256xf32>
    %246 = arith.mulf %244, %245 : vector<8x256xf32>
    %cst_75 = arith.constant 0.000000e+00 : f32
    %247 = vector.broadcast %cst_75 : f32 to vector<8x256xf32>
    %248 = arith.maximumf %246, %247 : vector<8x256xf32>
    %249 = vector.extract_strided_slice %225 {offsets = [0, 256], sizes = [8, 256], strides = [1, 1]} : vector<8x512xf32> to vector<8x256xf32>
    %250 = arith.mulf %249, %249 : vector<8x256xf32>
    %251 = tpu.concatenate %249, %250 in 0 : vector<8x256xf32>, vector<8x256xf32> -> vector<16x256xf32>
    %cst_76 = arith.constant dense<0.000000e+00> : vector<16x1xf32>
    %252 = tpu.matmul %251, %35, %cst_76 {dimension_numbers = #tpu.dot_dimension_numbers<[1], [0], [0], [1], [0, 0, 1, 1], [], []>} : vector<16x256xf32>, vector<256x1xf32>, vector<16x1xf32> -> vector<16x1xf32>
    %253 = vector.extract_strided_slice %252 {offsets = [0, 0], sizes = [8, 1], strides = [1, 1]} : vector<16x1xf32> to vector<8x1xf32>
    %cst_77 = arith.constant 3.906250e-03 : f32
    %254 = vector.broadcast %cst_77 : f32 to vector<8x1xf32>
    %255 = arith.mulf %253, %254 : vector<8x1xf32>
    %256 = vector.extract_strided_slice %252 {offsets = [8, 0], sizes = [8, 1], strides = [1, 1]} : vector<16x1xf32> to vector<8x1xf32>
    %cst_78 = arith.constant 3.906250e-03 : f32
    %257 = vector.broadcast %cst_78 : f32 to vector<8x1xf32>
    %258 = arith.mulf %256, %257 : vector<8x1xf32>
    %259 = arith.mulf %255, %255 : vector<8x1xf32>
    %260 = arith.subf %258, %259 : vector<8x1xf32>
    %cst_79 = arith.constant 9.99999974E-6 : f32
    %261 = vector.broadcast %cst_79 : f32 to vector<8x1xf32>
    %262 = arith.addf %260, %261 : vector<8x1xf32>
    %263 = math.rsqrt %262 : vector<8x1xf32>
    %cst_80 = arith.constant 0.999994993 : f32
    %264 = vector.broadcast %cst_80 : f32 to vector<8x1xf32>
    %265 = arith.mulf %263, %264 : vector<8x1xf32>
    %266 = vector.broadcast %255 : vector<8x1xf32> to vector<8x256xf32>
    %267 = arith.subf %249, %266 : vector<8x256xf32>
    %268 = vector.broadcast %265 : vector<8x1xf32> to vector<8x256xf32>
    %269 = arith.mulf %267, %268 : vector<8x256xf32>
    %cst_81 = arith.constant 0.000000e+00 : f32
    %270 = vector.broadcast %cst_81 : f32 to vector<8x256xf32>
    %271 = arith.maximumf %269, %270 : vector<8x256xf32>
    %272 = tpu.concatenate %248, %271 in 1 : vector<8x256xf32>, vector<8x256xf32> -> vector<8x512xf32>
    %273 = vector.extract_strided_slice %272 {offsets = [0, 0], sizes = [8, 256], strides = [1, 1]} : vector<8x512xf32> to vector<8x256xf32>
    %c0_82 = arith.constant 0 : index
    %c0_83 = arith.constant 0 : index
    %c0_84 = arith.constant 0 : index
    %274 = vector.load %arg9[%c0_82, %c0_83, %c0_84] : memref<2x8x256xf32, #tpu.memory_space<vmem>>, vector<1x8x256xf32>
    %275 = vector.shape_cast %274 : vector<1x8x256xf32> to vector<8x256xf32>
    %276 = vector.shape_cast %273 : vector<8x256xf32> to vector<1x8x256xf32>
    tpu.vector_store %arg9[%c0_82, %c0_83, %c0_84], %276 {strides = array<i32>} : memref<2x8x256xf32, #tpu.memory_space<vmem>>, vector<1x8x256xf32>,
    %277 = vector.extract_strided_slice %272 {offsets = [0, 256], sizes = [8, 256], strides = [1, 1]} : vector<8x512xf32> to vector<8x256xf32>
    %c1_85 = arith.constant 1 : index
    %c0_86 = arith.constant 0 : index
    %c0_87 = arith.constant 0 : index
    %278 = vector.load %arg9[%c1_85, %c0_86, %c0_87] : memref<2x8x256xf32, #tpu.memory_space<vmem>>, vector<1x8x256xf32>
    %279 = vector.shape_cast %278 : vector<1x8x256xf32> to vector<8x256xf32>
    %280 = vector.shape_cast %277 : vector<8x256xf32> to vector<1x8x256xf32>
    tpu.vector_store %arg9[%c1_85, %c0_86, %c0_87], %280 {strides = array<i32>} : memref<2x8x256xf32, #tpu.memory_space<vmem>>, vector<1x8x256xf32>,
    return
  }
}

</mosaic_0001>

<llo_original>
// kernel: tpu_custom_call.1
$region0: #{tpu_custom_call.1}
  #allocation0 [shape = 'u32[]', space=smem, size = 0x4, offset = 0x4, fixed_abs, tag = 'smem constant byte address 0x4 - core index']
  #allocation1 [shape = 'u32[144,128]{1,0:T(1,128)}', space=vmem, size = 0x12000, scoped, tag = 'internal scratch']
  %s0 = inlined_call_operand.vmem [shape: f32[2,4,256], index: 0, kind: input, shape index: {}]
  %s1 = inlined_call_operand.vmem [shape: f32[8,4], index: 1, kind: input, shape index: {}]
  %s2 = inlined_call_operand.vmem [shape: f32[8,1], index: 2, kind: input, shape index: {}]
  %s3 = inlined_call_operand.vmem [shape: f32[8,9], index: 3, kind: input, shape index: {}]
  %s4 = inlined_call_operand.vmem [shape: f32[8,1], index: 4, kind: input, shape index: {}]
  %s5 = inlined_call_operand.vmem [shape: f32[8,8], index: 5, kind: input, shape index: {}]
  %s6 = inlined_call_operand.vmem [shape: f32[8,1], index: 6, kind: input, shape index: {}]
  %s7 = inlined_call_operand.vmem [shape: f32[8,9], index: 7, kind: input, shape index: {}]
  %s8 = inlined_call_operand.vmem [shape: f32[8,1], index: 8, kind: input, shape index: {}]
  %s9 = inlined_call_operand.hbm [shape: f32[2,8,256], index: 9, kind: output, shape index: {}]
  %s10 = sld [smem:[#allocation0]]
  $region46: #{tpu_custom_call.1} parent=0
    _
  %s12 = ssub.s32 1, %s10
  %s13 = scalar_select 0, %s12, %s10
  $region1: #{tpu_custom_call.1} parent=0
    #allocation2 [shape = 'u8[16384]{0}', space=vmem, size = 0x4000, scoped, tag = 'output window, operand 0, single buffered']
    #allocation3 [shape = 's32[1]{0}', space=sflag, size = 0x4, scoped, tag = 'scoped memory for tpu_custom_call.1']
    %14 = vsyncpa [#allocation3], 0
    // Predicated region
    $region2: #{tpu_custom_call.1} parent=1 // pred_check
      _
    $region3: #{tpu_custom_call.1} parent=1 // pred_check_branch
      %16 = sbr.rel (0) target = $region5
    $region4: #{tpu_custom_call.1} parent=1 // pred_region
      _
    $region5: #{tpu_custom_call.1} parent=1 // pred_fallthru
      _
    // Predicated region
    $region6: #{tpu_custom_call.1} parent=1 // pred_check
      _
    $region7: #{tpu_custom_call.1} parent=1 // pred_check_branch
      %18 = sbr.rel (0) target = $region9
    $region8: #{tpu_custom_call.1} parent=1 // pred_region
      _
    $region9: #{tpu_custom_call.1} parent=1 // pred_fallthru
      _
    // Predicated region
    $region10: #{tpu_custom_call.1} parent=1 // pred_check
      _
    $region11: #{tpu_custom_call.1} parent=1 // pred_check_branch
      %20 = sbr.rel (0) target = $region13
    $region12: #{tpu_custom_call.1} parent=1 // pred_region
      _
    $region13: #{tpu_custom_call.1} parent=1 // pred_fallthru
      _
    // Predicated region
    $region14: #{tpu_custom_call.1} parent=1 // pred_check
      _
    $region15: #{tpu_custom_call.1} parent=1 // pred_check_branch
      %22 = sbr.rel (0) target = $region17
    $region16: #{tpu_custom_call.1} parent=1 // pred_region
      _
    $region17: #{tpu_custom_call.1} parent=1 // pred_fallthru
      _
    // Predicated region
    $region18: #{tpu_custom_call.1} parent=1 // pred_check
      _
    $region19: #{tpu_custom_call.1} parent=1 // pred_check_branch
      %24 = sbr.rel (0) target = $region21
    $region20: #{tpu_custom_call.1} parent=1 // pred_region
      _
    $region21: #{tpu_custom_call.1} parent=1 // pred_fallthru
      _
    // Predicated region
    $region22: #{tpu_custom_call.1} parent=1 // pred_check
      _
    $region23: #{tpu_custom_call.1} parent=1 // pred_check_branch
      %26 = sbr.rel (0) target = $region25
    $region24: #{tpu_custom_call.1} parent=1 // pred_region
      _
    $region25: #{tpu_custom_call.1} parent=1 // pred_fallthru
      _
    // Predicated region
    $region26: #{tpu_custom_call.1} parent=1 // pred_check
      _
    $region27: #{tpu_custom_call.1} parent=1 // pred_check_branch
      %28 = sbr.rel (0) target = $region29
    $region28: #{tpu_custom_call.1} parent=1 // pred_region
      _
    $region29: #{tpu_custom_call.1} parent=1 // pred_fallthru
      _
    // Predicated region
    $region30: #{tpu_custom_call.1} parent=1 // pred_check
      _
    $region31: #{tpu_custom_call.1} parent=1 // pred_check_branch
      %30 = sbr.rel (0) target = $region33
    $region32: #{tpu_custom_call.1} parent=1 // pred_region
      _
    $region33: #{tpu_custom_call.1} parent=1 // pred_fallthru
      _
    // Predicated region
    $region34: #{tpu_custom_call.1} parent=1 // pred_check
      _
    $region35: #{tpu_custom_call.1} parent=1 // pred_check_branch
      %32 = sbr.rel (0) target = $region37
    $region36: #{tpu_custom_call.1} parent=1 // pred_region
      _
    $region37: #{tpu_custom_call.1} parent=1 // pred_fallthru
      _
    %v33 = vlaneseq
    %v34 = vand.u32 %v33, 127
    %v35 = vadd.s32 %v34, 128
    %v36 = vadd.s32 %v34, 256
    %v37 = vadd.s32 %v34, 384
    %v38 = vand.u32 %v34, 255
    %v39 = vand.u32 %v35, 255
    %v40 = vand.u32 %v36, 255
    %v41 = vand.u32 %v37, 255
    %v42 = vshra.s32 %v38, 4
    %v43 = vshra.s32 %v39, 4
    %v44 = vshra.s32 %v40, 4
    %v45 = vshra.s32 %v41, 4
    %v46 = vand.u32 %v38, 15
    %v47 = vand.u32 %v39, 15
    %v48 = vand.u32 %v40, 15
    %v49 = vand.u32 %v41, 15
    %vm50 = vcmp.ge.s32.totalorder %v42, 1
    %vm51 = vcmp.ge.s32.totalorder %v43, 1
    %vm52 = vcmp.ge.s32.totalorder %v44, 1
    %vm53 = vcmp.ge.s32.totalorder %v45, 1
    %vm54 = vcmp.ge.s32.totalorder %v46, 1
    %vm55 = vcmp.ge.s32.totalorder %v47, 1
    %vm56 = vcmp.ge.s32.totalorder %v48, 1
    %vm57 = vcmp.ge.s32.totalorder %v49, 1
    %vm58 = vmand %vm50, %vm54
    %vm59 = vmand %vm51, %vm55
    %vm60 = vmand %vm52, %vm56
    %vm61 = vmand %vm53, %vm57
    %vm62 = vcmp.le.s32.totalorder %v46, 14
    %vm63 = vcmp.le.s32.totalorder %v47, 14
    %vm64 = vcmp.le.s32.totalorder %v48, 14
    %vm65 = vcmp.le.s32.totalorder %v49, 14
    %vm66 = vmand %vm50, %vm62
    %vm67 = vmand %vm51, %vm63
    %vm68 = vmand %vm52, %vm64
    %vm69 = vmand %vm53, %vm65
    %vm70 = vcmp.le.s32.totalorder %v42, 14
    %vm71 = vcmp.le.s32.totalorder %v43, 14
    %vm72 = vcmp.le.s32.totalorder %v44, 14
    %vm73 = vcmp.le.s32.totalorder %v45, 14
    %vm74 = vmand %vm70, %vm54
    %vm75 = vmand %vm71, %vm55
    %vm76 = vmand %vm72, %vm56
    %vm77 = vmand %vm73, %vm57
    %vm78 = vmand %vm70, %vm62
    %vm79 = vmand %vm71, %vm63
    %vm80 = vmand %vm72, %vm64
    %vm81 = vmand %vm73, %vm65
    %v82 = vld [vmem:[%s0] sm:$0xff]
    %s83 = scalar_lea.vmem %s0, 8
    %v84 = vld [vmem:[%s83] sm:$0xff]
    %v86 = vcombine.high %v82, %v82
    %v88 = vcombine.high %v84, %v84
    %v89 = vld [vmem:[%s1] sm:$0xff]
    %v90 = vld [vmem:[%s2] sm:$0xff]
    %v91 = vld [vmem:[%s3] sm:$0xff]
    %v92 = vld [vmem:[%s4] sm:$0xff]
    %94 = vset.pattern.permute.xlu0 0
    %95 = vperm.xlu0 %94, %v90
    %v96 = vpop.permute.xlu0 %95
    %vm98 = vcmask 31744
    %v100 = vsel %vm98, %v89, 0
    %vm102 = vcmask 1043456
    %v103 = vsel %vm102, %v82, 0
    %v105 = vsel %vm102, %v86, 0
    %v107 = vsel %vm102, %v84, 0
    %v109 = vsel %vm102, %v88, 0
    %111 = vmatprep.subr.mxu0 %v105
    %112 = vmatpush1.msra.mxu0 %v103
    %113 = vmatprep.subr.mxu0 0.0
    %114 = vmatpush1.msra.mxu0 0.0
    %115 = vmatprep.subr.mxu0 0.0
    %116 = vmatpush1.msra.mxu0 0.0
    %117 = vmatprep.subr.mxu0 0.0
    %118 = vmatpush1.msra.mxu0 0.0
    %119 = vmatprep.subr.mxu0 0.0
    %120 = vmatpush1.msra.mxu0 0.0
    %121 = vmatprep.subr.mxu0 0.0
    %122 = vmatpush1.msra.mxu0 0.0
    %123 = vmatprep.subr.mxu0 0.0
    %124 = vmatpush1.msra.mxu0 0.0
    %125 = vmatprep.subr.mxu0 0.0
    %126 = vmatpush1.msra.mxu0 0.0
    %127 = vmatprep.subr.mxu0 0.0
    %128 = vmatpush1.msra.mxu0 0.0
    %129 = vmatprep.subr.mxu0 0.0
    %130 = vmatpush1.msra.mxu0 0.0
    %131 = vmatprep.subr.mxu0 0.0
    %132 = vmatpush1.msra.mxu0 0.0
    %133 = vmatprep.subr.mxu0 0.0
    %134 = vmatpush1.msra.mxu0 0.0
    %135 = vmatprep.subr.mxu0 0.0
    %136 = vmatpush1.msra.mxu0 0.0
    %137 = vmatprep.subr.mxu0 0.0
    %138 = vmatpush1.msra.mxu0 0.0
    %139 = vmatprep.subr.mxu0 0.0
    %140 = vmatpush1.msra.mxu0 0.0
    %141 = vmatprep.subr.mxu0 0.0
    %142 = vmatpush1.msra.mxu0 0.0
    %143 = vmatprep.subr.mxu0 0.0
    %144 = vmatpush1.msra.mxu0 0.0
    %145 = vmatprep.subr.mxu0 0.0
    %146 = vmatpush1.msra.mxu0 0.0
    %147 = vmatprep.subr.mxu0 0.0
    %148 = vmatpush1.msra.mxu0 0.0
    %149 = vmatprep.subr.mxu0 0.0
    %150 = vmatpush1.msra.mxu0 0.0
    %151 = vmatprep.subr.mxu0 0.0
    %152 = vmatpush1.msra.mxu0 0.0
    %153 = vmatprep.subr.mxu0 0.0
    %154 = vmatpush1.msra.mxu0 0.0
    %155 = vmatprep.subr.mxu0 0.0
    %156 = vmatpush1.msra.mxu0 0.0
    %157 = vmatprep.subr.mxu0 0.0
    %158 = vmatpush1.msra.mxu0 0.0
    %159 = vmatprep.subr.mxu0 0.0
    %160 = vmatpush1.msra.mxu0 0.0
    %161 = vmatprep.subr.mxu0 0.0
    %162 = vmatpush1.msra.mxu0 0.0
    %163 = vmatprep.subr.mxu0 0.0
    %164 = vmatpush1.msra.mxu0 0.0
    %165 = vmatprep.subr.mxu0 0.0
    %166 = vmatpush1.msra.mxu0 0.0
    %167 = vmatprep.subr.mxu0 0.0
    %168 = vmatpush1.msra.mxu0 0.0
    %169 = vmatprep.subr.mxu0 0.0
    %170 = vmatpush1.msra.mxu0 0.0
    %171 = vmatprep.subr.mxu0 0.0
    %172 = vmatpush1.msra.mxu0 0.0
    %173 = vmatprep.subr.mxu0 0.0
    %174 = vmatpush1.msra.mxu0 0.0
    %175 = vmatprep.mubr.f32.mxu0 0.0
    %176 = vmatmul.mubr.f32.gmra.mrb[0].mxu0 %v100
    %v177 = vpop.f32.mrb[0].mxu0
    %v178 = vadd.f32 %v96, %v177
    %v179 = vpop.f32.mrb[0].mxu0
    %v180 = vadd.f32 %v96, %v179
    %181 = vdwg.mxu0
    %182 = vmatprep.subr.mxu0 %v109
    %183 = vmatpush1.msra.mxu0 %v107
    %184 = vmatprep.subr.mxu0 0.0
    %185 = vmatpush1.msra.mxu0 0.0
    %186 = vmatprep.subr.mxu0 0.0
    %187 = vmatpush1.msra.mxu0 0.0
    %188 = vmatprep.subr.mxu0 0.0
    %189 = vmatpush1.msra.mxu0 0.0
    %190 = vmatprep.subr.mxu0 0.0
    %191 = vmatpush1.msra.mxu0 0.0
    %192 = vmatprep.subr.mxu0 0.0
    %193 = vmatpush1.msra.mxu0 0.0
    %194 = vmatprep.subr.mxu0 0.0
    %195 = vmatpush1.msra.mxu0 0.0
    %196 = vmatprep.subr.mxu0 0.0
    %197 = vmatpush1.msra.mxu0 0.0
    %198 = vmatprep.subr.mxu0 0.0
    %199 = vmatpush1.msra.mxu0 0.0
    %200 = vmatprep.subr.mxu0 0.0
    %201 = vmatpush1.msra.mxu0 0.0
    %202 = vmatprep.subr.mxu0 0.0
    %203 = vmatpush1.msra.mxu0 0.0
    %204 = vmatprep.subr.mxu0 0.0
    %205 = vmatpush1.msra.mxu0 0.0
    %206 = vmatprep.subr.mxu0 0.0
    %207 = vmatpush1.msra.mxu0 0.0
    %208 = vmatprep.subr.mxu0 0.0
    %209 = vmatpush1.msra.mxu0 0.0
    %210 = vmatprep.subr.mxu0 0.0
    %211 = vmatpush1.msra.mxu0 0.0
    %212 = vmatprep.subr.mxu0 0.0
    %213 = vmatpush1.msra.mxu0 0.0
    %214 = vmatprep.subr.mxu0 0.0
    %215 = vmatpush1.msra.mxu0 0.0
    %216 = vmatprep.subr.mxu0 0.0
    %217 = vmatpush1.msra.mxu0 0.0
    %218 = vmatprep.subr.mxu0 0.0
    %219 = vmatpush1.msra.mxu0 0.0
    %220 = vmatprep.subr.mxu0 0.0
    %221 = vmatpush1.msra.mxu0 0.0
    %222 = vmatprep.subr.mxu0 0.0
    %223 = vmatpush1.msra.mxu0 0.0
    %224 = vmatprep.subr.mxu0 0.0
    %225 = vmatpush1.msra.mxu0 0.0
    %226 = vmatprep.subr.mxu0 0.0
    %227 = vmatpush1.msra.mxu0 0.0
    %228 = vmatprep.subr.mxu0 0.0
    %229 = vmatpush1.msra.mxu0 0.0
    %230 = vmatprep.subr.mxu0 0.0
    %231 = vmatpush1.msra.mxu0 0.0
    %232 = vmatprep.subr.mxu0 0.0
    %233 = vmatpush1.msra.mxu0 0.0
    %234 = vmatprep.subr.mxu0 0.0
    %235 = vmatpush1.msra.mxu0 0.0
    %236 = vmatprep.subr.mxu0 0.0
    %237 = vmatpush1.msra.mxu0 0.0
    %238 = vmatprep.subr.mxu0 0.0
    %239 = vmatpush1.msra.mxu0 0.0
    %240 = vmatprep.subr.mxu0 0.0
    %241 = vmatpush1.msra.mxu0 0.0
    %242 = vmatprep.subr.mxu0 0.0
    %243 = vmatpush1.msra.mxu0 0.0
    %244 = vmatprep.subr.mxu0 0.0
    %245 = vmatpush1.msra.mxu0 0.0
    %246 = vmatprep.mubr.f32.mxu0 0.0
    %247 = vmatmul.mubr.f32.gmra.mrb[0].mxu0 %v100
    %v248 = vpop.f32.mrb[0].mxu0
    %v249 = vadd.f32 %v96, %v248
    %v250 = vpop.f32.mrb[0].mxu0
    %v251 = vadd.f32 %v96, %v250
    %252 = vdwg.mxu0
    %254 = vset.pattern.permute.xlu0 0
    %255 = vperm.xlu0 %254, %v92
    %v256 = vpop.permute.xlu0 %255
    %258 = vrot.lane.b32.xlu0 %v178, 17
    %v259 = vpop.permute.xlu0 %258
    %260 = vrot.lane.b32.xlu0 %v180, 17
    %v261 = vpop.permute.xlu0 %260
    %262 = vrot.lane.b32.xlu0 %v249, 17
    %v263 = vpop.permute.xlu0 %262
    %264 = vrot.lane.b32.xlu0 %v251, 17
    %v265 = vpop.permute.xlu0 %264
    %vm266 = vcmp.lt.s32.totalorder %v34, 17
    %v267 = vsel %vm266, %v263, %v265
    %v268 = vsel %vm266, %v261, %v263
    %v269 = vsel %vm266, %v259, %v261
    %v270 = vsel %vm266, %v265, %v259
    %272 = vset.pattern.permute.xlu0 0
    %273 = vperm.xlu0 %272, %v91
    %v274 = vpop.permute.xlu0 %273
    %v276 = vmul.f32 %v270, %v274
    %v277 = vmul.f32 %v269, %v274
    %v278 = vmul.f32 %v268, %v274
    %v279 = vmul.f32 %v267, %v274
    %v280 = vsel %vm58, %v276, 0.0
    %v281 = vsel %vm59, %v277, 0.0
    %v282 = vsel %vm60, %v278, 0.0
    %v283 = vsel %vm61, %v279, 0.0
    %v284 = vadd.f32 %v256, %v280
    %v285 = vadd.f32 %v256, %v281
    %v286 = vadd.f32 %v256, %v282
    %v287 = vadd.f32 %v256, %v283
    %288 = vrot.lane.b32.xlu0 %v178, 16
    %v289 = vpop.permute.xlu0 %288
    %290 = vrot.lane.b32.xlu0 %v180, 16
    %v291 = vpop.permute.xlu0 %290
    %292 = vrot.lane.b32.xlu0 %v249, 16
    %v293 = vpop.permute.xlu0 %292
    %294 = vrot.lane.b32.xlu0 %v251, 16
    %v295 = vpop.permute.xlu0 %294
    %vm296 = vcmp.lt.s32.totalorder %v34, 16
    %v297 = vsel %vm296, %v293, %v295
    %v298 = vsel %vm296, %v291, %v293
    %v299 = vsel %vm296, %v289, %v291
    %v300 = vsel %vm296, %v295, %v289
    %301 = vset.pattern.permute.xlu0 1
    %302 = vperm.xlu0 %301, %v91
    %v303 = vpop.permute.xlu0 %302
    %v305 = vmul.f32 %v300, %v303
    %v306 = vmul.f32 %v299, %v303
    %v307 = vmul.f32 %v298, %v303
    %v308 = vmul.f32 %v297, %v303
    %v309 = vsel %vm50, %v305, 0.0
    %v310 = vsel %vm51, %v306, 0.0
    %v311 = vsel %vm52, %v307, 0.0
    %v312 = vsel %vm53, %v308, 0.0
    %v313 = vadd.f32 %v284, %v309
    %v314 = vadd.f32 %v285, %v310
    %v315 = vadd.f32 %v286, %v311
    %v316 = vadd.f32 %v287, %v312
    %317 = vrot.lane.b32.xlu0 %v178, 15
    %v318 = vpop.permute.xlu0 %317
    %319 = vrot.lane.b32.xlu0 %v180, 15
    %v320 = vpop.permute.xlu0 %319
    %321 = vrot.lane.b32.xlu0 %v249, 15
    %v322 = vpop.permute.xlu0 %321
    %323 = vrot.lane.b32.xlu0 %v251, 15
    %v324 = vpop.permute.xlu0 %323
    %vm325 = vcmp.lt.s32.totalorder %v34, 15
    %v326 = vsel %vm325, %v322, %v324
    %v327 = vsel %vm325, %v320, %v322
    %v328 = vsel %vm325, %v318, %v320
    %v329 = vsel %vm325, %v324, %v318
    %330 = vset.pattern.permute.xlu0 2
    %331 = vperm.xlu0 %330, %v91
    %v332 = vpop.permute.xlu0 %331
    %v334 = vmul.f32 %v329, %v332
    %v335 = vmul.f32 %v328, %v332
    %v336 = vmul.f32 %v327, %v332
    %v337 = vmul.f32 %v326, %v332
    %v338 = vsel %vm66, %v334, 0.0
    %v339 = vsel %vm67, %v335, 0.0
    %v340 = vsel %vm68, %v336, 0.0
    %v341 = vsel %vm69, %v337, 0.0
    %v342 = vadd.f32 %v313, %v338
    %v343 = vadd.f32 %v314, %v339
    %v344 = vadd.f32 %v315, %v340
    %v345 = vadd.f32 %v316, %v341
    %346 = vrot.lane.b32.xlu0 %v178, 1
    %v347 = vpop.permute.xlu0 %346
    %348 = vrot.lane.b32.xlu0 %v180, 1
    %v349 = vpop.permute.xlu0 %348
    %350 = vrot.lane.b32.xlu0 %v249, 1
    %v351 = vpop.permute.xlu0 %350
    %352 = vrot.lane.b32.xlu0 %v251, 1
    %v353 = vpop.permute.xlu0 %352
    %vm354 = vcmp.lt.s32.totalorder %v34, 1
    %v355 = vsel %vm354, %v351, %v353
    %v356 = vsel %vm354, %v349, %v351
    %v357 = vsel %vm354, %v347, %v349
    %v358 = vsel %vm354, %v353, %v347
    %359 = vset.pattern.permute.xlu0 3
    %360 = vperm.xlu0 %359, %v91
    %v361 = vpop.permute.xlu0 %360
    %v363 = vmul.f32 %v358, %v361
    %v364 = vmul.f32 %v357, %v361
    %v365 = vmul.f32 %v356, %v361
    %v366 = vmul.f32 %v355, %v361
    %v367 = vsel %vm54, %v363, 0.0
    %v368 = vsel %vm55, %v364, 0.0
    %v369 = vsel %vm56, %v365, 0.0
    %v370 = vsel %vm57, %v366, 0.0
    %v371 = vadd.f32 %v342, %v367
    %v372 = vadd.f32 %v343, %v368
    %v373 = vadd.f32 %v344, %v369
    %v374 = vadd.f32 %v345, %v370
    %375 = vset.pattern.permute.xlu0 4
    %376 = vperm.xlu0 %375, %v91
    %v377 = vpop.permute.xlu0 %376
    %v379 = vmul.f32 %v178, %v377
    %v380 = vmul.f32 %v180, %v377
    %v381 = vmul.f32 %v249, %v377
    %v382 = vmul.f32 %v251, %v377
    %v383 = vadd.f32 %v371, %v379
    %v384 = vadd.f32 %v372, %v380
    %v385 = vadd.f32 %v373, %v381
    %v386 = vadd.f32 %v374, %v382
    %387 = vrot.lane.b32.xlu0 %v178, 127
    %v388 = vpop.permute.xlu0 %387
    %389 = vrot.lane.b32.xlu0 %v180, 127
    %v390 = vpop.permute.xlu0 %389
    %391 = vrot.lane.b32.xlu0 %v249, 127
    %v392 = vpop.permute.xlu0 %391
    %393 = vrot.lane.b32.xlu0 %v251, 127
    %v394 = vpop.permute.xlu0 %393
    %vm395 = vcmp.lt.s32.totalorder %v34, 127
    %v396 = vsel %vm395, %v392, %v394
    %v397 = vsel %vm395, %v390, %v392
    %v398 = vsel %vm395, %v388, %v390
    %v399 = vsel %vm395, %v394, %v388
    %400 = vset.pattern.permute.xlu0 5
    %401 = vperm.xlu0 %400, %v91
    %v402 = vpop.permute.xlu0 %401
    %v404 = vmul.f32 %v398, %v402
    %v405 = vmul.f32 %v397, %v402
    %v406 = vmul.f32 %v396, %v402
    %v407 = vmul.f32 %v399, %v402
    %v408 = vsel %vm62, %v404, 0.0
    %v409 = vsel %vm63, %v405, 0.0
    %v410 = vsel %vm64, %v406, 0.0
    %v411 = vsel %vm65, %v407, 0.0
    %v412 = vadd.f32 %v383, %v408
    %v413 = vadd.f32 %v384, %v409
    %v414 = vadd.f32 %v385, %v410
    %v415 = vadd.f32 %v386, %v411
    %416 = vrot.lane.b32.xlu0 %v178, 113
    %v417 = vpop.permute.xlu0 %416
    %418 = vrot.lane.b32.xlu0 %v180, 113
    %v419 = vpop.permute.xlu0 %418
    %420 = vrot.lane.b32.xlu0 %v249, 113
    %v421 = vpop.permute.xlu0 %420
    %422 = vrot.lane.b32.xlu0 %v251, 113
    %v423 = vpop.permute.xlu0 %422
    %vm424 = vcmp.lt.s32.totalorder %v34, 113
    %v425 = vsel %vm424, %v421, %v423
    %v426 = vsel %vm424, %v419, %v421
    %v427 = vsel %vm424, %v417, %v419
    %v428 = vsel %vm424, %v423, %v417
    %429 = vset.pattern.permute.xlu0 6
    %430 = vperm.xlu0 %429, %v91
    %v431 = vpop.permute.xlu0 %430
    %v433 = vmul.f32 %v427, %v431
    %v434 = vmul.f32 %v426, %v431
    %v435 = vmul.f32 %v425, %v431
    %v436 = vmul.f32 %v428, %v431
    %v437 = vsel %vm74, %v433, 0.0
    %v438 = vsel %vm75, %v434, 0.0
    %v439 = vsel %vm76, %v435, 0.0
    %v440 = vsel %vm77, %v436, 0.0
    %v441 = vadd.f32 %v412, %v437
    %v442 = vadd.f32 %v413, %v438
    %v443 = vadd.f32 %v414, %v439
    %v444 = vadd.f32 %v415, %v440
    %445 = vrot.lane.b32.xlu0 %v178, 112
    %v446 = vpop.permute.xlu0 %445
    %447 = vrot.lane.b32.xlu0 %v180, 112
    %v448 = vpop.permute.xlu0 %447
    %449 = vrot.lane.b32.xlu0 %v249, 112
    %v450 = vpop.permute.xlu0 %449
    %451 = vrot.lane.b32.xlu0 %v251, 112
    %v452 = vpop.permute.xlu0 %451
    %vm453 = vcmp.lt.s32.totalorder %v34, 112
    %v454 = vsel %vm453, %v450, %v452
    %v455 = vsel %vm453, %v448, %v450
    %v456 = vsel %vm453, %v446, %v448
    %v457 = vsel %vm453, %v452, %v446
    %458 = vset.pattern.permute.xlu0 7
    %459 = vperm.xlu0 %458, %v91
    %v460 = vpop.permute.xlu0 %459
    %v462 = vmul.f32 %v456, %v460
    %v463 = vmul.f32 %v455, %v460
    %v464 = vmul.f32 %v454, %v460
    %v465 = vmul.f32 %v457, %v460
    %v466 = vsel %vm70, %v462, 0.0
    %v467 = vsel %vm71, %v463, 0.0
    %v468 = vsel %vm72, %v464, 0.0
    %v469 = vsel %vm73, %v465, 0.0
    %v470 = vadd.f32 %v441, %v466
    %v471 = vadd.f32 %v442, %v467
    %v472 = vadd.f32 %v443, %v468
    %v473 = vadd.f32 %v444, %v469
    %474 = vrot.lane.b32.xlu0 %v178, 111
    %v475 = vpop.permute.xlu0 %474
    %476 = vrot.lane.b32.xlu0 %v180, 111
    %v477 = vpop.permute.xlu0 %476
    %478 = vrot.lane.b32.xlu0 %v249, 111
    %v479 = vpop.permute.xlu0 %478
    %480 = vrot.lane.b32.xlu0 %v251, 111
    %v481 = vpop.permute.xlu0 %480
    %vm482 = vcmp.lt.s32.totalorder %v34, 111
    %v483 = vsel %vm482, %v479, %v481
    %v484 = vsel %vm482, %v477, %v479
    %v485 = vsel %vm482, %v475, %v477
    %v486 = vsel %vm482, %v481, %v475
    %487 = vset.pattern.permute.xlu0 8
    %488 = vperm.xlu0 %487, %v91
    %v489 = vpop.permute.xlu0 %488
    %v491 = vmul.f32 %v485, %v489
    %v492 = vmul.f32 %v484, %v489
    %v493 = vmul.f32 %v483, %v489
    %v494 = vmul.f32 %v486, %v489
    %v495 = vsel %vm78, %v491, 0.0
    %v496 = vsel %vm79, %v492, 0.0
    %v497 = vsel %vm80, %v493, 0.0
    %v498 = vsel %vm81, %v494, 0.0
    %v499 = vadd.f32 %v470, %v495
    %v500 = vadd.f32 %v471, %v496
    %v501 = vadd.f32 %v472, %v497
    %v502 = vadd.f32 %v473, %v498
    %v503 = vmul.f32 %v499, %v499
    %v504 = vmul.f32 %v500, %v500
    %505 = vmatprep.subr.mxu0 0.0
    %506 = vmatpush1.msra.mxu0 1.0
    %507 = vmatprep.subr.mxu0 0.0
    %508 = vmatpush1.msra.mxu0 1.0
    %509 = vmatprep.subr.mxu0 0.0
    %510 = vmatpush1.msra.mxu0 1.0
    %511 = vmatprep.subr.mxu0 0.0
    %512 = vmatpush1.msra.mxu0 1.0
    %513 = vmatprep.subr.mxu0 0.0
    %514 = vmatpush1.msra.mxu0 1.0
    %515 = vmatprep.subr.mxu0 0.0
    %516 = vmatpush1.msra.mxu0 1.0
    %517 = vmatprep.subr.mxu0 0.0
    %518 = vmatpush1.msra.mxu0 1.0
    %519 = vmatprep.subr.mxu0 0.0
    %520 = vmatpush1.msra.mxu0 1.0
    %521 = vmatprep.subr.mxu0 0.0
    %522 = vmatpush1.msra.mxu0 1.0
    %523 = vmatprep.subr.mxu0 0.0
    %524 = vmatpush1.msra.mxu0 1.0
    %525 = vmatprep.subr.mxu0 0.0
    %526 = vmatpush1.msra.mxu0 1.0
    %527 = vmatprep.subr.mxu0 0.0
    %528 = vmatpush1.msra.mxu0 1.0
    %529 = vmatprep.subr.mxu0 0.0
    %530 = vmatpush1.msra.mxu0 1.0
    %531 = vmatprep.subr.mxu0 0.0
    %532 = vmatpush1.msra.mxu0 1.0
    %533 = vmatprep.subr.mxu0 0.0
    %534 = vmatpush1.msra.mxu0 1.0
    %535 = vmatprep.subr.mxu0 0.0
    %536 = vmatpush1.msra.mxu0 1.0
    %537 = vmatprep.subr.mxu0 0.0
    %538 = vmatpush1.msra.mxu0 1.0
    %539 = vmatprep.subr.mxu0 0.0
    %540 = vmatpush1.msra.mxu0 1.0
    %541 = vmatprep.subr.mxu0 0.0
    %542 = vmatpush1.msra.mxu0 1.0
    %543 = vmatprep.subr.mxu0 0.0
    %544 = vmatpush1.msra.mxu0 1.0
    %545 = vmatprep.subr.mxu0 0.0
    %546 = vmatpush1.msra.mxu0 1.0
    %547 = vmatprep.subr.mxu0 0.0
    %548 = vmatpush1.msra.mxu0 1.0
    %549 = vmatprep.subr.mxu0 0.0
    %550 = vmatpush1.msra.mxu0 1.0
    %551 = vmatprep.subr.mxu0 0.0
    %552 = vmatpush1.msra.mxu0 1.0
    %553 = vmatprep.subr.mxu0 0.0
    %554 = vmatpush1.msra.mxu0 1.0
    %555 = vmatprep.subr.mxu0 0.0
    %556 = vmatpush1.msra.mxu0 1.0
    %557 = vmatprep.subr.mxu0 0.0
    %558 = vmatpush1.msra.mxu0 1.0
    %559 = vmatprep.subr.mxu0 0.0
    %560 = vmatpush1.msra.mxu0 1.0
    %561 = vmatprep.subr.mxu0 0.0
    %562 = vmatpush1.msra.mxu0 1.0
    %563 = vmatprep.subr.mxu0 0.0
    %564 = vmatpush1.msra.mxu0 1.0
    %565 = vmatprep.subr.mxu0 0.0
    %566 = vmatpush1.msra.mxu0 1.0
    %567 = vmatprep.subr.mxu0 0.0
    %568 = vmatpush1.msra.mxu0 1.0
    %569 = vmatprep.mubr.f32.mxu0 %v500
    %570 = vmatmul.mubr.f32.gmra.mrb[0].mxu0 %v499
    %v571 = vpop.f32.mrb[0].mxu0
    %v572 = vadd.f32 0.0, %v571
    %v573 = vpop.f32.mrb[0].mxu0
    %574 = vmatprep.mubr.f32.mxu0 %v504
    %575 = vmatmul.mubr.f32.gmra.mrb[0].mxu0 %v503
    %v576 = vpop.f32.mrb[0].mxu0
    %v577 = vadd.f32 0.0, %v576
    %v578 = vpop.f32.mrb[0].mxu0
    %579 = vdwg.mxu0
    %v580 = vmul.f32 %v572, 0.00390625
    %v581 = vmul.f32 %v577, 0.00390625
    %v582 = vmul.f32 %v580, %v580
    %v583 = vsub.f32 %v581, %v582
    %v584 = vadd.f32 %v583, 1e-05
    %v585 = vrsqrt.pop %v584
    %v586 = vmul.f32 %v585, 0.999995
    %588 = vset.pattern.permute.xlu0 0
    %589 = vperm.xlu0 %588, %v580
    %v590 = vpop.permute.xlu0 %589
    %v592 = vsub.f32 %v499, %v590
    %v593 = vsub.f32 %v500, %v590
    %595 = vset.pattern.permute.xlu0 0
    %596 = vperm.xlu0 %595, %v586
    %v597 = vpop.permute.xlu0 %596
    %v599 = vmul.f32 %v592, %v597
    %v600 = vmul.f32 %v593, %v597
    %v601 = vmax.f32 %v599, 0.0
    %v602 = vmax.f32 %v600, 0.0
    %v603 = vmul.f32 %v501, %v501
    %v604 = vmul.f32 %v502, %v502
    %605 = vmatprep.subr.mxu0 0.0
    %606 = vmatpush1.msra.mxu0 1.0
    %607 = vmatprep.subr.mxu0 0.0
    %608 = vmatpush1.msra.mxu0 1.0
    %609 = vmatprep.subr.mxu0 0.0
    %610 = vmatpush1.msra.mxu0 1.0
    %611 = vmatprep.subr.mxu0 0.0
    %612 = vmatpush1.msra.mxu0 1.0
    %613 = vmatprep.subr.mxu0 0.0
    %614 = vmatpush1.msra.mxu0 1.0
    %615 = vmatprep.subr.mxu0 0.0
    %616 = vmatpush1.msra.mxu0 1.0
    %617 = vmatprep.subr.mxu0 0.0
    %618 = vmatpush1.msra.mxu0 1.0
    %619 = vmatprep.subr.mxu0 0.0
    %620 = vmatpush1.msra.mxu0 1.0
    %621 = vmatprep.subr.mxu0 0.0
    %622 = vmatpush1.msra.mxu0 1.0
    %623 = vmatprep.subr.mxu0 0.0
    %624 = vmatpush1.msra.mxu0 1.0
    %625 = vmatprep.subr.mxu0 0.0
    %626 = vmatpush1.msra.mxu0 1.0
    %627 = vmatprep.subr.mxu0 0.0
    %628 = vmatpush1.msra.mxu0 1.0
    %629 = vmatprep.subr.mxu0 0.0
    %630 = vmatpush1.msra.mxu0 1.0
    %631 = vmatprep.subr.mxu0 0.0
    %632 = vmatpush1.msra.mxu0 1.0
    %633 = vmatprep.subr.mxu0 0.0
    %634 = vmatpush1.msra.mxu0 1.0
    %635 = vmatprep.subr.mxu0 0.0
    %636 = vmatpush1.msra.mxu0 1.0
    %637 = vmatprep.subr.mxu0 0.0
    %638 = vmatpush1.msra.mxu0 1.0
    %639 = vmatprep.subr.mxu0 0.0
    %640 = vmatpush1.msra.mxu0 1.0
    %641 = vmatprep.subr.mxu0 0.0
    %642 = vmatpush1.msra.mxu0 1.0
    %643 = vmatprep.subr.mxu0 0.0
    %644 = vmatpush1.msra.mxu0 1.0
    %645 = vmatprep.subr.mxu0 0.0
    %646 = vmatpush1.msra.mxu0 1.0
    %647 = vmatprep.subr.mxu0 0.0
    %648 = vmatpush1.msra.mxu0 1.0
    %649 = vmatprep.subr.mxu0 0.0
    %650 = vmatpush1.msra.mxu0 1.0
    %651 = vmatprep.subr.mxu0 0.0
    %652 = vmatpush1.msra.mxu0 1.0
    %653 = vmatprep.subr.mxu0 0.0
    %654 = vmatpush1.msra.mxu0 1.0
    %655 = vmatprep.subr.mxu0 0.0
    %656 = vmatpush1.msra.mxu0 1.0
    %657 = vmatprep.subr.mxu0 0.0
    %658 = vmatpush1.msra.mxu0 1.0
    %659 = vmatprep.subr.mxu0 0.0
    %660 = vmatpush1.msra.mxu0 1.0
    %661 = vmatprep.subr.mxu0 0.0
    %662 = vmatpush1.msra.mxu0 1.0
    %663 = vmatprep.subr.mxu0 0.0
    %664 = vmatpush1.msra.mxu0 1.0
    %665 = vmatprep.subr.mxu0 0.0
    %666 = vmatpush1.msra.mxu0 1.0
    %667 = vmatprep.subr.mxu0 0.0
    %668 = vmatpush1.msra.mxu0 1.0
    %669 = vmatprep.mubr.f32.mxu0 %v502
    %670 = vmatmul.mubr.f32.gmra.mrb[0].mxu0 %v501
    %v671 = vpop.f32.mrb[0].mxu0
    %v672 = vadd.f32 0.0, %v671
    %v673 = vpop.f32.mrb[0].mxu0
    %674 = vmatprep.mubr.f32.mxu0 %v604
    %675 = vmatmul.mubr.f32.gmra.mrb[0].mxu0 %v603
    %v676 = vpop.f32.mrb[0].mxu0
    %v677 = vadd.f32 0.0, %v676
    %v678 = vpop.f32.mrb[0].mxu0
    %679 = vdwg.mxu0
    %v680 = vmul.f32 %v672, 0.00390625
    %v681 = vmul.f32 %v677, 0.00390625
    %v682 = vmul.f32 %v680, %v680
    %v683 = vsub.f32 %v681, %v682
    %v684 = vadd.f32 %v683, 1e-05
    %v685 = vrsqrt.pop %v684
    %v686 = vmul.f32 %v685, 0.999995
    %688 = vset.pattern.permute.xlu0 0
    %689 = vperm.xlu0 %688, %v680
    %v690 = vpop.permute.xlu0 %689
    %v692 = vsub.f32 %v501, %v690
    %v693 = vsub.f32 %v502, %v690
    %695 = vset.pattern.permute.xlu0 0
    %696 = vperm.xlu0 %695, %v686
    %v697 = vpop.permute.xlu0 %696
    %v699 = vmul.f32 %v692, %v697
    %v700 = vmul.f32 %v693, %v697
    %v701 = vmax.f32 %v699, 0.0
    %v702 = vmax.f32 %v700, 0.0
    %v703 = vld [vmem:[%s5] sm:$0xff]
    %v704 = vld [vmem:[%s6] sm:$0xff]
    %v705 = vld [vmem:[%s7] sm:$0xff]
    %v706 = vld [vmem:[%s8] sm:$0xff]
    %708 = vset.pattern.permute.xlu0 0
    %709 = vperm.xlu0 %708, %v704
    %v710 = vpop.permute.xlu0 %709
    %vm712 = vcmask 64512
    %v714 = vsel %vm712, %v703, 0
    %716 = vmatprep.subr.mxu0 %v602
    %717 = vmatpush1.msra.mxu0 %v601
    %718 = vmatprep.subr.mxu0 0.0
    %719 = vmatpush1.msra.mxu0 0.0
    %720 = vmatprep.subr.mxu0 0.0
    %721 = vmatpush1.msra.mxu0 0.0
    %722 = vmatprep.subr.mxu0 0.0
    %723 = vmatpush1.msra.mxu0 0.0
    %724 = vmatprep.subr.mxu0 0.0
    %725 = vmatpush1.msra.mxu0 0.0
    %726 = vmatprep.subr.mxu0 0.0
    %727 = vmatpush1.msra.mxu0 0.0
    %728 = vmatprep.subr.mxu0 0.0
    %729 = vmatpush1.msra.mxu0 0.0
    %730 = vmatprep.subr.mxu0 0.0
    %731 = vmatpush1.msra.mxu0 0.0
    %732 = vmatprep.subr.mxu0 0.0
    %733 = vmatpush1.msra.mxu0 0.0
    %734 = vmatprep.subr.mxu0 0.0
    %735 = vmatpush1.msra.mxu0 0.0
    %736 = vmatprep.subr.mxu0 0.0
    %737 = vmatpush1.msra.mxu0 0.0
    %738 = vmatprep.subr.mxu0 0.0
    %739 = vmatpush1.msra.mxu0 0.0
    %740 = vmatprep.subr.mxu0 0.0
    %741 = vmatpush1.msra.mxu0 0.0
    %742 = vmatprep.subr.mxu0 0.0
    %743 = vmatpush1.msra.mxu0 0.0
    %744 = vmatprep.subr.mxu0 0.0
    %745 = vmatpush1.msra.mxu0 0.0
    %746 = vmatprep.subr.mxu0 0.0
    %747 = vmatpush1.msra.mxu0 0.0
    %748 = vmatprep.subr.mxu0 0.0
    %749 = vmatpush1.msra.mxu0 0.0
    %750 = vmatprep.subr.mxu0 0.0
    %751 = vmatpush1.msra.mxu0 0.0
    %752 = vmatprep.subr.mxu0 0.0
    %753 = vmatpush1.msra.mxu0 0.0
    %754 = vmatprep.subr.mxu0 0.0
    %755 = vmatpush1.msra.mxu0 0.0
    %756 = vmatprep.subr.mxu0 0.0
    %757 = vmatpush1.msra.mxu0 0.0
    %758 = vmatprep.subr.mxu0 0.0
    %759 = vmatpush1.msra.mxu0 0.0
    %760 = vmatprep.subr.mxu0 0.0
    %761 = vmatpush1.msra.mxu0 0.0
    %762 = vmatprep.subr.mxu0 0.0
    %763 = vmatpush1.msra.mxu0 0.0
    %764 = vmatprep.subr.mxu0 0.0
    %765 = vmatpush1.msra.mxu0 0.0
    %766 = vmatprep.subr.mxu0 0.0
    %767 = vmatpush1.msra.mxu0 0.0
    %768 = vmatprep.subr.mxu0 0.0
    %769 = vmatpush1.msra.mxu0 0.0
    %770 = vmatprep.subr.mxu0 0.0
    %771 = vmatpush1.msra.mxu0 0.0
    %772 = vmatprep.subr.mxu0 0.0
    %773 = vmatpush1.msra.mxu0 0.0
    %774 = vmatprep.subr.mxu0 0.0
    %775 = vmatpush1.msra.mxu0 0.0
    %776 = vmatprep.subr.mxu0 0.0
    %777 = vmatpush1.msra.mxu0 0.0
    %778 = vmatprep.subr.mxu0 0.0
    %779 = vmatpush1.msra.mxu0 0.0
    %780 = vmatprep.mubr.f32.mxu0 0.0
    %781 = vmatmul.mubr.f32.gmra.mrb[0].mxu0 %v714
    %v782 = vpop.f32.mrb[0].mxu0
    %v783 = vadd.f32 %v710, %v782
    %v784 = vpop.f32.mrb[0].mxu0
    %v785 = vadd.f32 %v710, %v784
    %786 = vdwg.mxu0
    %787 = vmatprep.subr.mxu0 %v702
    %788 = vmatpush1.msra.mxu0 %v701
    %789 = vmatprep.subr.mxu0 0.0
    %790 = vmatpush1.msra.mxu0 0.0
    %791 = vmatprep.subr.mxu0 0.0
    %792 = vmatpush1.msra.mxu0 0.0
    %793 = vmatprep.subr.mxu0 0.0
    %794 = vmatpush1.msra.mxu0 0.0
    %795 = vmatprep.subr.mxu0 0.0
    %796 = vmatpush1.msra.mxu0 0.0
    %797 = vmatprep.subr.mxu0 0.0
    %798 = vmatpush1.msra.mxu0 0.0
    %799 = vmatprep.subr.mxu0 0.0
    %800 = vmatpush1.msra.mxu0 0.0
    %801 = vmatprep.subr.mxu0 0.0
    %802 = vmatpush1.msra.mxu0 0.0
    %803 = vmatprep.subr.mxu0 0.0
    %804 = vmatpush1.msra.mxu0 0.0
    %805 = vmatprep.subr.mxu0 0.0
    %806 = vmatpush1.msra.mxu0 0.0
    %807 = vmatprep.subr.mxu0 0.0
    %808 = vmatpush1.msra.mxu0 0.0
    %809 = vmatprep.subr.mxu0 0.0
    %810 = vmatpush1.msra.mxu0 0.0
    %811 = vmatprep.subr.mxu0 0.0
    %812 = vmatpush1.msra.mxu0 0.0
    %813 = vmatprep.subr.mxu0 0.0
    %814 = vmatpush1.msra.mxu0 0.0
    %815 = vmatprep.subr.mxu0 0.0
    %816 = vmatpush1.msra.mxu0 0.0
    %817 = vmatprep.subr.mxu0 0.0
    %818 = vmatpush1.msra.mxu0 0.0
    %819 = vmatprep.subr.mxu0 0.0
    %820 = vmatpush1.msra.mxu0 0.0
    %821 = vmatprep.subr.mxu0 0.0
    %822 = vmatpush1.msra.mxu0 0.0
    %823 = vmatprep.subr.mxu0 0.0
    %824 = vmatpush1.msra.mxu0 0.0
    %825 = vmatprep.subr.mxu0 0.0
    %826 = vmatpush1.msra.mxu0 0.0
    %827 = vmatprep.subr.mxu0 0.0
    %828 = vmatpush1.msra.mxu0 0.0
    %829 = vmatprep.subr.mxu0 0.0
    %830 = vmatpush1.msra.mxu0 0.0
    %831 = vmatprep.subr.mxu0 0.0
    %832 = vmatpush1.msra.mxu0 0.0
    %833 = vmatprep.subr.mxu0 0.0
    %834 = vmatpush1.msra.mxu0 0.0
    %835 = vmatprep.subr.mxu0 0.0
    %836 = vmatpush1.msra.mxu0 0.0
    %837 = vmatprep.subr.mxu0 0.0
    %838 = vmatpush1.msra.mxu0 0.0
    %839 = vmatprep.subr.mxu0 0.0
    %840 = vmatpush1.msra.mxu0 0.0
    %841 = vmatprep.subr.mxu0 0.0
    %842 = vmatpush1.msra.mxu0 0.0
    %843 = vmatprep.subr.mxu0 0.0
    %844 = vmatpush1.msra.mxu0 0.0
    %845 = vmatprep.subr.mxu0 0.0
    %846 = vmatpush1.msra.mxu0 0.0
    %847 = vmatprep.subr.mxu0 0.0
    %848 = vmatpush1.msra.mxu0 0.0
    %849 = vmatprep.subr.mxu0 0.0
    %850 = vmatpush1.msra.mxu0 0.0
    %851 = vmatprep.mubr.f32.mxu0 0.0
    %852 = vmatmul.mubr.f32.gmra.mrb[0].mxu0 %v714
    %v853 = vpop.f32.mrb[0].mxu0
    %v854 = vadd.f32 %v710, %v853
    %v855 = vpop.f32.mrb[0].mxu0
    %v856 = vadd.f32 %v710, %v855
    %857 = vdwg.mxu0
    %859 = vset.pattern.permute.xlu0 0
    %860 = vperm.xlu0 %859, %v706
    %v861 = vpop.permute.xlu0 %860
    %863 = vrot.lane.b32.xlu0 %v783, 17
    %v864 = vpop.permute.xlu0 %863
    %865 = vrot.lane.b32.xlu0 %v785, 17
    %v866 = vpop.permute.xlu0 %865
    %867 = vrot.lane.b32.xlu0 %v854, 17
    %v868 = vpop.permute.xlu0 %867
    %869 = vrot.lane.b32.xlu0 %v856, 17
    %v870 = vpop.permute.xlu0 %869
    %v871 = vsel %vm266, %v868, %v870
    %v872 = vsel %vm266, %v866, %v868
    %v873 = vsel %vm266, %v864, %v866
    %v874 = vsel %vm266, %v870, %v864
    %876 = vset.pattern.permute.xlu0 0
    %877 = vperm.xlu0 %876, %v705
    %v878 = vpop.permute.xlu0 %877
    %v880 = vmul.f32 %v874, %v878
    %v881 = vmul.f32 %v873, %v878
    %v882 = vmul.f32 %v872, %v878
    %v883 = vmul.f32 %v871, %v878
    %v884 = vsel %vm58, %v880, 0.0
    %v885 = vsel %vm59, %v881, 0.0
    %v886 = vsel %vm60, %v882, 0.0
    %v887 = vsel %vm61, %v883, 0.0
    %v888 = vadd.f32 %v861, %v884
    %v889 = vadd.f32 %v861, %v885
    %v890 = vadd.f32 %v861, %v886
    %v891 = vadd.f32 %v861, %v887
    %892 = vrot.lane.b32.xlu0 %v783, 16
    %v893 = vpop.permute.xlu0 %892
    %894 = vrot.lane.b32.xlu0 %v785, 16
    %v895 = vpop.permute.xlu0 %894
    %896 = vrot.lane.b32.xlu0 %v854, 16
    %v897 = vpop.permute.xlu0 %896
    %898 = vrot.lane.b32.xlu0 %v856, 16
    %v899 = vpop.permute.xlu0 %898
    %v900 = vsel %vm296, %v897, %v899
    %v901 = vsel %vm296, %v895, %v897
    %v902 = vsel %vm296, %v893, %v895
    %v903 = vsel %vm296, %v899, %v893
    %904 = vset.pattern.permute.xlu0 1
    %905 = vperm.xlu0 %904, %v705
    %v906 = vpop.permute.xlu0 %905
    %v908 = vmul.f32 %v903, %v906
    %v909 = vmul.f32 %v902, %v906
    %v910 = vmul.f32 %v901, %v906
    %v911 = vmul.f32 %v900, %v906
    %v912 = vsel %vm50, %v908, 0.0
    %v913 = vsel %vm51, %v909, 0.0
    %v914 = vsel %vm52, %v910, 0.0
    %v915 = vsel %vm53, %v911, 0.0
    %v916 = vadd.f32 %v888, %v912
    %v917 = vadd.f32 %v889, %v913
    %v918 = vadd.f32 %v890, %v914
    %v919 = vadd.f32 %v891, %v915
    %920 = vrot.lane.b32.xlu0 %v783, 15
    %v921 = vpop.permute.xlu0 %920
    %922 = vrot.lane.b32.xlu0 %v785, 15
    %v923 = vpop.permute.xlu0 %922
    %924 = vrot.lane.b32.xlu0 %v854, 15
    %v925 = vpop.permute.xlu0 %924
    %926 = vrot.lane.b32.xlu0 %v856, 15
    %v927 = vpop.permute.xlu0 %926
    %v928 = vsel %vm325, %v925, %v927
    %v929 = vsel %vm325, %v923, %v925
    %v930 = vsel %vm325, %v921, %v923
    %v931 = vsel %vm325, %v927, %v921
    %932 = vset.pattern.permute.xlu0 2
    %933 = vperm.xlu0 %932, %v705
    %v934 = vpop.permute.xlu0 %933
    %v936 = vmul.f32 %v931, %v934
    %v937 = vmul.f32 %v930, %v934
    %v938 = vmul.f32 %v929, %v934
    %v939 = vmul.f32 %v928, %v934
    %v940 = vsel %vm66, %v936, 0.0
    %v941 = vsel %vm67, %v937, 0.0
    %v942 = vsel %vm68, %v938, 0.0
    %v943 = vsel %vm69, %v939, 0.0
    %v944 = vadd.f32 %v916, %v940
    %v945 = vadd.f32 %v917, %v941
    %v946 = vadd.f32 %v918, %v942
    %v947 = vadd.f32 %v919, %v943
    %948 = vrot.lane.b32.xlu0 %v783, 1
    %v949 = vpop.permute.xlu0 %948
    %950 = vrot.lane.b32.xlu0 %v785, 1
    %v951 = vpop.permute.xlu0 %950
    %952 = vrot.lane.b32.xlu0 %v854, 1
    %v953 = vpop.permute.xlu0 %952
    %954 = vrot.lane.b32.xlu0 %v856, 1
    %v955 = vpop.permute.xlu0 %954
    %v956 = vsel %vm354, %v953, %v955
    %v957 = vsel %vm354, %v951, %v953
    %v958 = vsel %vm354, %v949, %v951
    %v959 = vsel %vm354, %v955, %v949
    %960 = vset.pattern.permute.xlu0 3
    %961 = vperm.xlu0 %960, %v705
    %v962 = vpop.permute.xlu0 %961
    %v964 = vmul.f32 %v959, %v962
    %v965 = vmul.f32 %v958, %v962
    %v966 = vmul.f32 %v957, %v962
    %v967 = vmul.f32 %v956, %v962
    %v968 = vsel %vm54, %v964, 0.0
    %v969 = vsel %vm55, %v965, 0.0
    %v970 = vsel %vm56, %v966, 0.0
    %v971 = vsel %vm57, %v967, 0.0
    %v972 = vadd.f32 %v944, %v968
    %v973 = vadd.f32 %v945, %v969
    %v974 = vadd.f32 %v946, %v970
    %v975 = vadd.f32 %v947, %v971
    %976 = vset.pattern.permute.xlu0 4
    %977 = vperm.xlu0 %976, %v705
    %v978 = vpop.permute.xlu0 %977
    %v980 = vmul.f32 %v783, %v978
    %v981 = vmul.f32 %v785, %v978
    %v982 = vmul.f32 %v854, %v978
    %v983 = vmul.f32 %v856, %v978
    %v984 = vadd.f32 %v972, %v980
    %v985 = vadd.f32 %v973, %v981
    %v986 = vadd.f32 %v974, %v982
    %v987 = vadd.f32 %v975, %v983
    %988 = vrot.lane.b32.xlu0 %v783, 127
    %v989 = vpop.permute.xlu0 %988
    %990 = vrot.lane.b32.xlu0 %v785, 127
    %v991 = vpop.permute.xlu0 %990
    %992 = vrot.lane.b32.xlu0 %v854, 127
    %v993 = vpop.permute.xlu0 %992
    %994 = vrot.lane.b32.xlu0 %v856, 127
    %v995 = vpop.permute.xlu0 %994
    %v996 = vsel %vm395, %v993, %v995
    %v997 = vsel %vm395, %v991, %v993
    %v998 = vsel %vm395, %v989, %v991
    %v999 = vsel %vm395, %v995, %v989
    %1000 = vset.pattern.permute.xlu0 5
    %1001 = vperm.xlu0 %1000, %v705
    %v1002 = vpop.permute.xlu0 %1001
    %v1004 = vmul.f32 %v998, %v1002
    %v1005 = vmul.f32 %v997, %v1002
    %v1006 = vmul.f32 %v996, %v1002
    %v1007 = vmul.f32 %v999, %v1002
    %v1008 = vsel %vm62, %v1004, 0.0
    %v1009 = vsel %vm63, %v1005, 0.0
    %v1010 = vsel %vm64, %v1006, 0.0
    %v1011 = vsel %vm65, %v1007, 0.0
    %v1012 = vadd.f32 %v984, %v1008
    %v1013 = vadd.f32 %v985, %v1009
    %v1014 = vadd.f32 %v986, %v1010
    %v1015 = vadd.f32 %v987, %v1011
    %1016 = vrot.lane.b32.xlu0 %v783, 113
    %v1017 = vpop.permute.xlu0 %1016
    %1018 = vrot.lane.b32.xlu0 %v785, 113
    %v1019 = vpop.permute.xlu0 %1018
    %1020 = vrot.lane.b32.xlu0 %v854, 113
    %v1021 = vpop.permute.xlu0 %1020
    %1022 = vrot.lane.b32.xlu0 %v856, 113
    %v1023 = vpop.permute.xlu0 %1022
    %v1024 = vsel %vm424, %v1021, %v1023
    %v1025 = vsel %vm424, %v1019, %v1021
    %v1026 = vsel %vm424, %v1017, %v1019
    %v1027 = vsel %vm424, %v1023, %v1017
    %1028 = vset.pattern.permute.xlu0 6
    %1029 = vperm.xlu0 %1028, %v705
    %v1030 = vpop.permute.xlu0 %1029
    %v1032 = vmul.f32 %v1026, %v1030
    %v1033 = vmul.f32 %v1025, %v1030
    %v1034 = vmul.f32 %v1024, %v1030
    %v1035 = vmul.f32 %v1027, %v1030
    %v1036 = vsel %vm74, %v1032, 0.0
    %v1037 = vsel %vm75, %v1033, 0.0
    %v1038 = vsel %vm76, %v1034, 0.0
    %v1039 = vsel %vm77, %v1035, 0.0
    %v1040 = vadd.f32 %v1012, %v1036
    %v1041 = vadd.f32 %v1013, %v1037
    %v1042 = vadd.f32 %v1014, %v1038
    %v1043 = vadd.f32 %v1015, %v1039
    %1044 = vrot.lane.b32.xlu0 %v783, 112
    %v1045 = vpop.permute.xlu0 %1044
    %1046 = vrot.lane.b32.xlu0 %v785, 112
    %v1047 = vpop.permute.xlu0 %1046
    %1048 = vrot.lane.b32.xlu0 %v854, 112
    %v1049 = vpop.permute.xlu0 %1048
    %1050 = vrot.lane.b32.xlu0 %v856, 112
    %v1051 = vpop.permute.xlu0 %1050
    %v1052 = vsel %vm453, %v1049, %v1051
    %v1053 = vsel %vm453, %v1047, %v1049
    %v1054 = vsel %vm453, %v1045, %v1047
    %v1055 = vsel %vm453, %v1051, %v1045
    %1056 = vset.pattern.permute.xlu0 7
    %1057 = vperm.xlu0 %1056, %v705
    %v1058 = vpop.permute.xlu0 %1057
    %v1060 = vmul.f32 %v1054, %v1058
    %v1061 = vmul.f32 %v1053, %v1058
    %v1062 = vmul.f32 %v1052, %v1058
    %v1063 = vmul.f32 %v1055, %v1058
    %v1064 = vsel %vm70, %v1060, 0.0
    %v1065 = vsel %vm71, %v1061, 0.0
    %v1066 = vsel %vm72, %v1062, 0.0
    %v1067 = vsel %vm73, %v1063, 0.0
    %v1068 = vadd.f32 %v1040, %v1064
    %v1069 = vadd.f32 %v1041, %v1065
    %v1070 = vadd.f32 %v1042, %v1066
    %v1071 = vadd.f32 %v1043, %v1067
    %1072 = vrot.lane.b32.xlu0 %v783, 111
    %v1073 = vpop.permute.xlu0 %1072
    %1074 = vrot.lane.b32.xlu0 %v785, 111
    %v1075 = vpop.permute.xlu0 %1074
    %1076 = vrot.lane.b32.xlu0 %v854, 111
    %v1077 = vpop.permute.xlu0 %1076
    %1078 = vrot.lane.b32.xlu0 %v856, 111
    %v1079 = vpop.permute.xlu0 %1078
    %v1080 = vsel %vm482, %v1077, %v1079
    %v1081 = vsel %vm482, %v1075, %v1077
    %v1082 = vsel %vm482, %v1073, %v1075
    %v1083 = vsel %vm482, %v1079, %v1073
    %1084 = vset.pattern.permute.xlu0 8
    %1085 = vperm.xlu0 %1084, %v705
    %v1086 = vpop.permute.xlu0 %1085
    %v1088 = vmul.f32 %v1082, %v1086
    %v1089 = vmul.f32 %v1081, %v1086
    %v1090 = vmul.f32 %v1080, %v1086
    %v1091 = vmul.f32 %v1083, %v1086
    %v1092 = vsel %vm78, %v1088, 0.0
    %v1093 = vsel %vm79, %v1089, 0.0
    %v1094 = vsel %vm80, %v1090, 0.0
    %v1095 = vsel %vm81, %v1091, 0.0
    %v1096 = vadd.f32 %v1068, %v1092
    %v1097 = vadd.f32 %v1069, %v1093
    %v1098 = vadd.f32 %v1070, %v1094
    %v1099 = vadd.f32 %v1071, %v1095
    %v1100 = vmul.f32 %v1096, %v1096
    %v1101 = vmul.f32 %v1097, %v1097
    %1102 = vmatprep.subr.mxu0 0.0
    %1103 = vmatpush1.msra.mxu0 1.0
    %1104 = vmatprep.subr.mxu0 0.0
    %1105 = vmatpush1.msra.mxu0 1.0
    %1106 = vmatprep.subr.mxu0 0.0
    %1107 = vmatpush1.msra.mxu0 1.0
    %1108 = vmatprep.subr.mxu0 0.0
    %1109 = vmatpush1.msra.mxu0 1.0
    %1110 = vmatprep.subr.mxu0 0.0
    %1111 = vmatpush1.msra.mxu0 1.0
    %1112 = vmatprep.subr.mxu0 0.0
    %1113 = vmatpush1.msra.mxu0 1.0
    %1114 = vmatprep.subr.mxu0 0.0
    %1115 = vmatpush1.msra.mxu0 1.0
    %1116 = vmatprep.subr.mxu0 0.0
    %1117 = vmatpush1.msra.mxu0 1.0
    %1118 = vmatprep.subr.mxu0 0.0
    %1119 = vmatpush1.msra.mxu0 1.0
    %1120 = vmatprep.subr.mxu0 0.0
    %1121 = vmatpush1.msra.mxu0 1.0
    %1122 = vmatprep.subr.mxu0 0.0
    %1123 = vmatpush1.msra.mxu0 1.0
    %1124 = vmatprep.subr.mxu0 0.0
    %1125 = vmatpush1.msra.mxu0 1.0
    %1126 = vmatprep.subr.mxu0 0.0
    %1127 = vmatpush1.msra.mxu0 1.0
    %1128 = vmatprep.subr.mxu0 0.0
    %1129 = vmatpush1.msra.mxu0 1.0
    %1130 = vmatprep.subr.mxu0 0.0
    %1131 = vmatpush1.msra.mxu0 1.0
    %1132 = vmatprep.subr.mxu0 0.0
    %1133 = vmatpush1.msra.mxu0 1.0
    %1134 = vmatprep.subr.mxu0 0.0
    %1135 = vmatpush1.msra.mxu0 1.0
    %1136 = vmatprep.subr.mxu0 0.0
    %1137 = vmatpush1.msra.mxu0 1.0
    %1138 = vmatprep.subr.mxu0 0.0
    %1139 = vmatpush1.msra.mxu0 1.0
    %1140 = vmatprep.subr.mxu0 0.0
    %1141 = vmatpush1.msra.mxu0 1.0
    %1142 = vmatprep.subr.mxu0 0.0
    %1143 = vmatpush1.msra.mxu0 1.0
    %1144 = vmatprep.subr.mxu0 0.0
    %1145 = vmatpush1.msra.mxu0 1.0
    %1146 = vmatprep.subr.mxu0 0.0
    %1147 = vmatpush1.msra.mxu0 1.0
    %1148 = vmatprep.subr.mxu0 0.0
    %1149 = vmatpush1.msra.mxu0 1.0
    %1150 = vmatprep.subr.mxu0 0.0
    %1151 = vmatpush1.msra.mxu0 1.0
    %1152 = vmatprep.subr.mxu0 0.0
    %1153 = vmatpush1.msra.mxu0 1.0
    %1154 = vmatprep.subr.mxu0 0.0
    %1155 = vmatpush1.msra.mxu0 1.0
    %1156 = vmatprep.subr.mxu0 0.0
    %1157 = vmatpush1.msra.mxu0 1.0
    %1158 = vmatprep.subr.mxu0 0.0
    %1159 = vmatpush1.msra.mxu0 1.0
    %1160 = vmatprep.subr.mxu0 0.0
    %1161 = vmatpush1.msra.mxu0 1.0
    %1162 = vmatprep.subr.mxu0 0.0
    %1163 = vmatpush1.msra.mxu0 1.0
    %1164 = vmatprep.subr.mxu0 0.0
    %1165 = vmatpush1.msra.mxu0 1.0
    %1166 = vmatprep.mubr.f32.mxu0 %v1097
    %1167 = vmatmul.mubr.f32.gmra.mrb[0].mxu0 %v1096
    %v1168 = vpop.f32.mrb[0].mxu0
    %v1169 = vadd.f32 0.0, %v1168
    %v1170 = vpop.f32.mrb[0].mxu0
    %1171 = vmatprep.mubr.f32.mxu0 %v1101
    %1172 = vmatmul.mubr.f32.gmra.mrb[0].mxu0 %v1100
    %v1173 = vpop.f32.mrb[0].mxu0
    %v1174 = vadd.f32 0.0, %v1173
    %v1175 = vpop.f32.mrb[0].mxu0
    %1176 = vdwg.mxu0
    %v1177 = vmul.f32 %v1169, 0.00390625
    %v1178 = vmul.f32 %v1174, 0.00390625
    %v1179 = vmul.f32 %v1177, %v1177
    %v1180 = vsub.f32 %v1178, %v1179
    %v1181 = vadd.f32 %v1180, 1e-05
    %v1182 = vrsqrt.pop %v1181
    %v1183 = vmul.f32 %v1182, 0.999995
    %1185 = vset.pattern.permute.xlu0 0
    %1186 = vperm.xlu0 %1185, %v1177
    %v1187 = vpop.permute.xlu0 %1186
    %v1189 = vsub.f32 %v1096, %v1187
    %v1190 = vsub.f32 %v1097, %v1187
    %1192 = vset.pattern.permute.xlu0 0
    %1193 = vperm.xlu0 %1192, %v1183
    %v1194 = vpop.permute.xlu0 %1193
    %v1196 = vmul.f32 %v1189, %v1194
    %v1197 = vmul.f32 %v1190, %v1194
    %v1198 = vmax.f32 %v1196, 0.0
    %v1199 = vmax.f32 %v1197, 0.0
    %v1200 = vmul.f32 %v1098, %v1098
    %v1201 = vmul.f32 %v1099, %v1099
    %1202 = vmatprep.subr.mxu0 0.0
    %1203 = vmatpush1.msra.mxu0 1.0
    %1204 = vmatprep.subr.mxu0 0.0
    %1205 = vmatpush1.msra.mxu0 1.0
    %1206 = vmatprep.subr.mxu0 0.0
    %1207 = vmatpush1.msra.mxu0 1.0
    %1208 = vmatprep.subr.mxu0 0.0
    %1209 = vmatpush1.msra.mxu0 1.0
    %1210 = vmatprep.subr.mxu0 0.0
    %1211 = vmatpush1.msra.mxu0 1.0
    %1212 = vmatprep.subr.mxu0 0.0
    %1213 = vmatpush1.msra.mxu0 1.0
    %1214 = vmatprep.subr.mxu0 0.0
    %1215 = vmatpush1.msra.mxu0 1.0
    %1216 = vmatprep.subr.mxu0 0.0
    %1217 = vmatpush1.msra.mxu0 1.0
    %1218 = vmatprep.subr.mxu0 0.0
    %1219 = vmatpush1.msra.mxu0 1.0
    %1220 = vmatprep.subr.mxu0 0.0
    %1221 = vmatpush1.msra.mxu0 1.0
    %1222 = vmatprep.subr.mxu0 0.0
    %1223 = vmatpush1.msra.mxu0 1.0
    %1224 = vmatprep.subr.mxu0 0.0
    %1225 = vmatpush1.msra.mxu0 1.0
    %1226 = vmatprep.subr.mxu0 0.0
    %1227 = vmatpush1.msra.mxu0 1.0
    %1228 = vmatprep.subr.mxu0 0.0
    %1229 = vmatpush1.msra.mxu0 1.0
    %1230 = vmatprep.subr.mxu0 0.0
    %1231 = vmatpush1.msra.mxu0 1.0
    %1232 = vmatprep.subr.mxu0 0.0
    %1233 = vmatpush1.msra.mxu0 1.0
    %1234 = vmatprep.subr.mxu0 0.0
    %1235 = vmatpush1.msra.mxu0 1.0
    %1236 = vmatprep.subr.mxu0 0.0
    %1237 = vmatpush1.msra.mxu0 1.0
    %1238 = vmatprep.subr.mxu0 0.0
    %1239 = vmatpush1.msra.mxu0 1.0
    %1240 = vmatprep.subr.mxu0 0.0
    %1241 = vmatpush1.msra.mxu0 1.0
    %1242 = vmatprep.subr.mxu0 0.0
    %1243 = vmatpush1.msra.mxu0 1.0
    %1244 = vmatprep.subr.mxu0 0.0
    %1245 = vmatpush1.msra.mxu0 1.0
    %1246 = vmatprep.subr.mxu0 0.0
    %1247 = vmatpush1.msra.mxu0 1.0
    %1248 = vmatprep.subr.mxu0 0.0
    %1249 = vmatpush1.msra.mxu0 1.0
    %1250 = vmatprep.subr.mxu0 0.0
    %1251 = vmatpush1.msra.mxu0 1.0
    %1252 = vmatprep.subr.mxu0 0.0
    %1253 = vmatpush1.msra.mxu0 1.0
    %1254 = vmatprep.subr.mxu0 0.0
    %1255 = vmatpush1.msra.mxu0 1.0
    %1256 = vmatprep.subr.mxu0 0.0
    %1257 = vmatpush1.msra.mxu0 1.0
    %1258 = vmatprep.subr.mxu0 0.0
    %1259 = vmatpush1.msra.mxu0 1.0
    %1260 = vmatprep.subr.mxu0 0.0
    %1261 = vmatpush1.msra.mxu0 1.0
    %1262 = vmatprep.subr.mxu0 0.0
    %1263 = vmatpush1.msra.mxu0 1.0
    %1264 = vmatprep.subr.mxu0 0.0
    %1265 = vmatpush1.msra.mxu0 1.0
    %1266 = vmatprep.mubr.f32.mxu0 %v1099
    %1267 = vmatmul.mubr.f32.gmra.mrb[0].mxu0 %v1098
    %v1268 = vpop.f32.mrb[0].mxu0
    %v1269 = vadd.f32 0.0, %v1268
    %v1270 = vpop.f32.mrb[0].mxu0
    %1271 = vmatprep.mubr.f32.mxu0 %v1201
    %1272 = vmatmul.mubr.f32.gmra.mrb[0].mxu0 %v1200
    %v1273 = vpop.f32.mrb[0].mxu0
    %v1274 = vadd.f32 0.0, %v1273
    %v1275 = vpop.f32.mrb[0].mxu0
    %1276 = vdwg.mxu0
    %v1277 = vmul.f32 %v1269, 0.00390625
    %v1278 = vmul.f32 %v1274, 0.00390625
    %v1279 = vmul.f32 %v1277, %v1277
    %v1280 = vsub.f32 %v1278, %v1279
    %v1281 = vadd.f32 %v1280, 1e-05
    %v1282 = vrsqrt.pop %v1281
    %v1283 = vmul.f32 %v1282, 0.999995
    %1285 = vset.pattern.permute.xlu0 0
    %1286 = vperm.xlu0 %1285, %v1277
    %v1287 = vpop.permute.xlu0 %1286
    %v1289 = vsub.f32 %v1098, %v1287
    %v1290 = vsub.f32 %v1099, %v1287
    %1292 = vset.pattern.permute.xlu0 0
    %1293 = vperm.xlu0 %1292, %v1283
    %v1294 = vpop.permute.xlu0 %1293
    %v1296 = vmul.f32 %v1289, %v1294
    %v1297 = vmul.f32 %v1290, %v1294
    %v1298 = vmax.f32 %v1296, 0.0
    %v1299 = vmax.f32 %v1297, 0.0
    %1300 = vst [vmem:[#allocation2] sm:$0xff] %v1198
    %1301 = vst [vmem:[#allocation2 + $0x8] sm:$0xff] %v1199
    %s1302 = scalar_lea.vmem [#allocation2], 16
    %1303 = vst [vmem:[%s1302] sm:$0xff] %v1298
    %1304 = vst [vmem:[%s1302 + $0x8] sm:$0xff] %v1299
    // Predicated region
    $region38: #{tpu_custom_call.1} parent=1 // pred_check
      _
    $region39: #{tpu_custom_call.1} parent=1 // pred_check_branch
      %1306 = sbr.rel (0) target = $region41
    $region40: #{tpu_custom_call.1} parent=1 // pred_region
      %s1308 = ssub.s32 512, 512
      %1309 = vsyncadd [#allocation3], %s1308
      %s1310 = sshll.u32 [#allocation2], 4
      %s1311 = int_to_ptr.vmem [resolvable:$true] %s1310
      %1316 = dma.vmem_to_hbm [thread:$0]  %s1311, 512, %s9, [#allocation3], 256, 256, 16
    $region41: #{tpu_custom_call.1} parent=1 // pred_fallthru
      _
    // Predicated region
    $region42: #{tpu_custom_call.1} parent=1 // pred_check
      _
    $region43: #{tpu_custom_call.1} parent=1 // pred_check_branch
      %1318 = sbr.rel (0) target = $region45
    $region44: #{tpu_custom_call.1} parent=1 // pred_region
      %1319 = dma.done [#allocation3], 512
    $region45: #{tpu_custom_call.1} parent=1 // pred_fallthru
      _
    %1320 = vsyncpa [#allocation3], 1

</llo_original>
